<compile_context>
chip_gen: v7x
topology: tpu7x:2x2x1
jax: 0.10.0
libtpu: 0.0.40
codegen_flags: <defaults>
</compile_context>

<pallas_src>
import jax
import jax.numpy as jnp
from jax.experimental import pallas as pl
from jax.experimental.pallas import tpu as pltpu

_LANE = 128          # TPU lane width: feature / output widths are zero-padded to this
_TM_TARGET = 512     # row (dst) tile target
_TK_TARGET = 2048    # reduction (src) tile target -> T*tm*tk*2B ~ 4 MiB A_hat blocks


# ------------------------- planning helpers -------------------------

def _round_up(n, m):
    return ((n + m - 1) // m) * m


def _vmem_limit_bytes():
    """Generation-aware scoped-VMEM limit: ~96 MiB on 128 MiB parts (v5e/v6e),
    ~48 MiB on 64 MiB-per-TensorCore parts (v7x). Safe fallback if the query fails."""
    cap = 64 * 1024 * 1024
    try:
        info = pltpu.get_tpu_info()
        cap = int(getattr(info, "vmem_capacity_bytes", cap))
    except Exception:
        pass
    return min(cap * 3 // 4, 96 * 1024 * 1024)


def plan_tiles(num_nodes, num_edge_types):
    """Pick (tm, tk, padded_N). tm | tk | padded_N (all powers of two >= 128 where
    possible), with tk shrunk so the double-buffered A_hat stream stays inside
    ~1/3 of the scoped VMEM budget."""
    limit = _vmem_limit_bytes()
    tk = _LANE
    while tk < num_nodes and tk < _TK_TARGET:
        tk *= 2
    tm = min(_TM_TARGET, tk)
    while tk > _LANE and 2 * num_edge_types * tm * tk * 2 > limit // 3:
        tk //= 2
        tm = min(_TM_TARGET, tk)
    return tm, tk, _round_up(num_nodes, tk)


# ------------------------- Pallas kernels -------------------------

def _accumulate_neighbors(a_ref, xs_ref, acc_ref):
    """acc (T*tm, din_p) += A_hat block (T, tm, tk) @ x_src (tk, din_p), f32 accumulate.

    The (T, tm) leading dims are collapsed (tile-aligned since tm % 128 == 0, so the
    reshape is a free view) so a single large-M bf16 MXU matmul covers every edge
    type per K step instead of T separate small dots."""
    @pl.when(pl.program_id(1) == 0)
    def _():
        acc_ref[...] = jnp.zeros_like(acc_ref)

    n_types, tm, tk = a_ref.shape
    a = a_ref[...].reshape(n_types * tm, tk)
    acc_ref[...] += jnp.dot(a, xs_ref[...], preferred_element_type=jnp.float32)


def _project_rows(acc_ref, xr_ref, wl_ref, wr_ref, b_ref, width_pad):
    """relu(agg_t @ W_l[t] + x_self @ W_r[t] + b[t]) per edge type, concatenated (and
    zero-padded) into one lane-dense (tm, width_pad) row block (f32 in registers)."""
    n_types, _, dh = wl_ref.shape
    tm = xr_ref.shape[0]
    x_self = xr_ref[...]                                   # bf16
    cols = []
    for t in range(n_types):                               # static unroll (few edge types)
        agg = acc_ref[t * tm:(t + 1) * tm, :].astype(jnp.bfloat16)
        h = (jnp.dot(agg, wl_ref[t], preferred_element_type=jnp.float32)
             + jnp.dot(x_self, wr_ref[t], preferred_element_type=jnp.float32)
             + b_ref[t])
        cols.append(jnp.maximum(h, 0.0))                   # dropout(p=0.5) = identity (eval)
    block = jnp.concatenate(cols, axis=1)                  # (tm, n_types*dh)
    pad = width_pad - n_types * dh
    if pad:
        block = jnp.concatenate([block, jnp.zeros((tm, pad), block.dtype)], axis=1)
    return block


def sage_layer_kernel(a_ref, xs_ref, xr_ref, wl_ref, wr_ref, b_ref, o_ref, acc_ref):
    _accumulate_neighbors(a_ref, xs_ref, acc_ref)

    @pl.when(pl.program_id(1) == pl.num_programs(1) - 1)
    def _():
        block = _project_rows(acc_ref, xr_ref, wl_ref, wr_ref, b_ref, o_ref.shape[1])
        o_ref[...] = block.astype(o_ref.dtype)             # single unmasked 128-lane store


def sage_layer_mlp_kernel(a_ref, xs_ref, xr_ref, wl_ref, wr_ref, b_ref,
                          w1_ref, b1_ref, w2_ref, b2_ref,
                          emb_ref, pred_ref, acc_ref):
    _accumulate_neighbors(a_ref, xs_ref, acc_ref)

    @pl.when(pl.program_id(1) == pl.num_programs(1) - 1)
    def _():
        block = _project_rows(acc_ref, xr_ref, wl_ref, wr_ref, b_ref, emb_ref.shape[1])
        emb_ref[...] = block.astype(emb_ref.dtype)
        # Fused MLP head: consume the embedding row block while it is still in VMEM.
        h1 = jnp.maximum(
            jnp.dot(block.astype(jnp.bfloat16), w1_ref[...],
                    preferred_element_type=jnp.float32) + b1_ref[...], 0.0)
        pred_ref[...] = (jnp.dot(h1.astype(jnp.bfloat16), w2_ref[...],
                                 preferred_element_type=jnp.float32) + b2_ref[...])


# ------------------------- wrappers -------------------------

def _compiler_params():
    return pltpu.CompilerParams(
        dimension_semantics=("parallel", "arbitrary"),   # row tiles shard across TCs (v7x)
        vmem_limit_bytes=_vmem_limit_bytes())


def _layer_specs(n_types, din_p, dh, width_p, tm, tk):
    in_specs = [
        # TODO(synk): pipeline_mode=pl.Buffered(3) on A_hat only, if profiling still shows
        #             exposed DMA at K-tile boundaries after the larger tiles.
        pl.BlockSpec((n_types, tm, tk), lambda i, k: (0, i, k)),     # A_hat (bf16, 1/deg folded)
        pl.BlockSpec((tk, din_p), lambda i, k: (k, 0)),              # x as neighbour source (K axis)
        pl.BlockSpec((tm, din_p), lambda i, k: (i, 0)),              # x as self / root (row tile)
        pl.BlockSpec((n_types, din_p, dh), lambda i, k: (0, 0, 0)),  # W_l (bf16, rows padded to 128)
        pl.BlockSpec((n_types, din_p, dh), lambda i, k: (0, 0, 0)),  # W_r (bf16, rows padded to 128)
        pl.BlockSpec((n_types, 1, dh), lambda i, k: (0, 0, 0)),      # bias (f32)
    ]
    emb_spec = pl.BlockSpec((tm, width_p), lambda i, k: (i, 0))
    scratch = [pltpu.VMEM((n_types * tm, din_p), jnp.float32)]       # fused A_hat @ x accumulator
    return in_specs, emb_spec, scratch


def sage_layer(A_hat, x_pad, w_l, w_r, b, tm, tk, out_dtype=jnp.bfloat16):
    n_types, n_pad, _ = A_hat.shape
    din_p = x_pad.shape[1]
    dh = w_l.shape[2]
    width_p = _round_up(n_types * dh, _LANE)
    in_specs, emb_spec, scratch = _layer_specs(n_types, din_p, dh, width_p, tm, tk)
    return pl.pallas_call(
        sage_layer_kernel,
        out_shape=jax.ShapeDtypeStruct((n_pad, width_p), out_dtype),
        grid_spec=pltpu.PrefetchScalarGridSpec(
            num_scalar_prefetch=0,
            grid=(n_pad // tm, n_pad // tk),
            in_specs=in_specs,
            out_specs=emb_spec,
            scratch_shapes=scratch),
        compiler_params=_compiler_params(),
    )(A_hat, x_pad, x_pad, w_l, w_r, b)


def sage_layer_with_head(A_hat, x_pad, w_l, w_r, b, mlp_pad, tm, tk):
    n_types, n_pad, _ = A_hat.shape
    din_p = x_pad.shape[1]
    dh = w_l.shape[2]
    width_p = _round_up(n_types * dh, _LANE)
    w1, b1, w2, b2 = mlp_pad
    d_hid_p = w1.shape[1]
    d_out_p = w2.shape[1]
    in_specs, emb_spec, scratch = _layer_specs(n_types, din_p, dh, width_p, tm, tk)
    in_specs = in_specs + [
        pl.BlockSpec((width_p, d_hid_p), lambda i, k: (0, 0)),
        pl.BlockSpec((1, d_hid_p), lambda i, k: (0, 0)),
        pl.BlockSpec((d_hid_p, d_out_p), lambda i, k: (0, 0)),
        pl.BlockSpec((1, d_out_p), lambda i, k: (0, 0)),
    ]
    pred_spec = pl.BlockSpec((tm, d_out_p), lambda i, k: (i, 0))
    return pl.pallas_call(
        sage_layer_mlp_kernel,
        out_shape=(jax.ShapeDtypeStruct((n_pad, width_p), jnp.float32),
                   jax.ShapeDtypeStruct((n_pad, d_out_p), jnp.float32)),
        grid_spec=pltpu.PrefetchScalarGridSpec(
            num_scalar_prefetch=0,
            grid=(n_pad // tm, n_pad // tk),
            in_specs=in_specs,
            out_specs=(emb_spec, pred_spec),
            scratch_shapes=scratch),
        compiler_params=_compiler_params(),
    )(A_hat, x_pad, x_pad, w_l, w_r, b, w1, b1, w2, b2)


# ------------------------- glue (plain JAX) -------------------------

def build_adjacency(edge_index, edge_weight, edge_types, padded_nodes):
    """(T, Np, Np) dense adjacency with the SAGE 'mean' 1/deg folded in, stored bf16.
    Padded rows/cols (>= real N) stay zero so they never contaminate real nodes."""
    src, dst = edge_index[0], edge_index[1]
    mats = []
    for t in edge_types:
        mask = (edge_weight == t).astype(jnp.float32)
        A = jnp.zeros((padded_nodes, padded_nodes), jnp.float32).at[dst, src].add(mask)
        deg = A.sum(axis=1, keepdims=True)
        mats.append(A * jnp.where(deg > 0, 1.0 / deg, 0.0))
    return jnp.stack(mats, axis=0).astype(jnp.bfloat16)


def init_params(key, dim_in, dim_h, dim_out, num_layers, num_edge_types):
    layers = []
    for l in range(num_layers):
        din = dim_in if l == 0 else dim_h * num_edge_types
        scale = float(1.0 / (din ** 0.5))
        key, k1, k2, k3 = jax.random.split(key, 4)
        layers.append(dict(
            w_l=jax.random.uniform(k1, (num_edge_types, din, dim_h), jnp.float32, -scale, scale),
            w_r=jax.random.uniform(k2, (num_edge_types, din, dim_h), jnp.float32, -scale, scale),
            b=jax.random.uniform(k3, (num_edge_types, 1, dim_h), jnp.float32, -scale, scale)))
    din_mlp = dim_h * num_edge_types
    d_hid = 20
    key, k1, k2, k3, k4 = jax.random.split(key, 5)
    s1 = float(1.0 / (din_mlp ** 0.5))
    s2 = float(1.0 / (d_hid ** 0.5))
    mlp = dict(
        w1=jax.random.uniform(k1, (din_mlp, d_hid), jnp.float32, -s1, s1),
        b1=jax.random.uniform(k2, (1, d_hid), jnp.float32, -s1, s1),
        w2=jax.random.uniform(k3, (d_hid, dim_out), jnp.float32, -s2, s2),
        b2=jax.random.uniform(k4, (1, dim_out), jnp.float32, -s2, s2))
    return {"layers": layers, "mlp": mlp}


def _pad_weight_rows(w, din_p):
    n_types, din, dh = w.shape
    if din != din_p:
        w = jnp.pad(w, ((0, 0), (0, din_p - din), (0, 0)))
    return w.astype(jnp.bfloat16)


def _pad_mlp(mlp, width_p):
    d_in, d_hid = mlp["w1"].shape
    d_out = mlp["w2"].shape[1]
    d_hid_p = _round_up(d_hid, _LANE)
    d_out_p = _round_up(d_out, _LANE)
    w1 = jnp.zeros((width_p, d_hid_p), jnp.bfloat16).at[:d_in, :d_hid].set(
        mlp["w1"].astype(jnp.bfloat16))
    b1 = jnp.zeros((1, d_hid_p), jnp.float32).at[:, :d_hid].set(mlp["b1"])
    w2 = jnp.zeros((d_hid_p, d_out_p), jnp.bfloat16).at[:d_hid, :d_out].set(
        mlp["w2"].astype(jnp.bfloat16))
    b2 = jnp.zeros((1, d_out_p), jnp.float32).at[:, :d_out].set(mlp["b2"])
    return (w1, b1, w2, b2)


def graphsage_forward_and_predict(params, x, A_hat, tm, tk):
    """Eval-mode forward (dropout = identity) + fused MLP head; one Pallas kernel/layer."""
    n_types, n_pad, _ = A_hat.shape
    num_nodes, dim_in = x.shape
    dh = params["layers"][0]["w_l"].shape[2]
    d_out = params["mlp"]["w2"].shape[1]
    width_p = _round_up(n_types * dh, _LANE)

    # Zero-pad node features to (n_pad, lane multiple) and cast to bf16 once.
    din_p0 = _round_up(dim_in, _LANE)
    emb = jnp.zeros((n_pad, din_p0), jnp.bfloat16).at[:num_nodes, :dim_in].set(
        x.astype(jnp.bfloat16))

    pred = None
    n_layers = len(params["layers"])
    for li, layer in enumerate(params["layers"]):
        din_p = _round_up(layer["w_l"].shape[1], _LANE)
        assert emb.shape[1] == din_p
        w_l = _pad_weight_rows(layer["w_l"], din_p)
        w_r = _pad_weight_rows(layer["w_r"], din_p)
        if li < n_layers - 1:
            # Intermediate layers stream back bf16 (halved writeback) and feed the next
            # layer directly — no extra XLA cast pass between layers.
            emb = sage_layer(A_hat, emb, w_l, w_r, layer["b"], tm, tk,
                             out_dtype=jnp.bfloat16)
        else:
            emb, pred = sage_layer_with_head(A_hat, emb, w_l, w_r, layer["b"],
                                             _pad_mlp(params["mlp"], width_p), tm, tk)
    return emb[:num_nodes, :n_types * dh], pred[:num_nodes, :d_out]


# ------------------------- pure-JAX reference -------------------------

def _ref_forward_and_predict(params, x, A_hat, num_nodes):
    HI = jax.lax.Precision.HIGHEST
    q = lambda v: v.astype(jnp.bfloat16).astype(jnp.float32)   # kernel's bf16 quantisation
    A = A_hat.astype(jnp.float32)[:, :num_nodes, :num_nodes]
    n_types = A.shape[0]
    emb = x
    for layer in params["layers"]:
        x_q = q(emb)
        hs = []
        for t in range(n_types):
            agg = q(jnp.dot(A[t], x_q, precision=HI))
            h = (jnp.dot(agg, q(layer["w_l"][t]), precision=HI)
                 + jnp.dot(x_q, q(layer["w_r"][t]), precision=HI)
                 + layer["b"][t])
            hs.append(jnp.maximum(h, 0.0))
        emb = jnp.concatenate(hs, axis=1)
    m = params["mlp"]
    h1 = jnp.maximum(jnp.dot(q(emb), q(m["w1"]), precision=HI) + m["b1"], 0.0)
    pred = jnp.dot(q(h1), q(m["w2"]), precision=HI) + m["b2"]
    return emb, pred


# ------------------------- main -------------------------

if __name__ == "__main__":
    key = jax.random.PRNGKey(0)

    # small synthetic graph
    N = 32            # nodes
    E = 128           # edges
    dim_in = 16
    dim_h = 32
    dim_out = 4
    num_layers = 2
    edge_types = [0, 1]

    key, kx, ks, kd, kw, kp = jax.random.split(key, 6)
    x = jax.random.normal(kx, (N, dim_in), jnp.float32)
    src = jax.random.randint(ks, (E,), 0, N, jnp.int32)
    dst = jax.random.randint(kd, (E,), 0, N, jnp.int32)
    edge_index = jnp.stack([src, dst], axis=0)                          # (2, E)
    edge_weight = jax.random.randint(kw, (E,), 0, len(edge_types), jnp.int32)

    params = init_params(kp, dim_in, dim_h, dim_out, num_layers, len(edge_types))

    tm, tk, n_pad = plan_tiles(N, len(edge_types))
    A_hat = build_adjacency(edge_index, edge_weight, edge_types, n_pad)  # (T, Np, Np) bf16

    emb, out = graphsage_forward_and_predict(params, x, A_hat, tm, tk)
    jax.block_until_ready(emb)
    jax.block_until_ready(out)

    # correctness check vs. pure-JAX reference (same bf16 quantisation points)
    emb_ref, out_ref = _ref_forward_and_predict(params, x, A_hat, N)
    assert emb.shape == (N, dim_h * len(edge_types))
    assert out.shape == (N, dim_out)
    assert jnp.allclose(emb, emb_ref, atol=2e-3, rtol=2e-3), \
        float(jnp.max(jnp.abs(emb - emb_ref)))
    assert jnp.allclose(out, out_ref, atol=2e-3, rtol=2e-3), \
        float(jnp.max(jnp.abs(out - out_ref)))

    print("KERNEL_OK")
</pallas_src>

<mosaic_0001>
module attributes {stable_mosaic.version = 11 : i64} {
  func.func @sage_layer_kernel(%arg0: i32, %arg1: i32, %arg2: memref<2x128x128xbf16, #tpu.memory_space<vmem>>, %arg3: memref<128x128xbf16, #tpu.memory_space<vmem>>, %arg4: memref<128x128xbf16, #tpu.memory_space<vmem>>, %arg5: memref<2x128x32xbf16, #tpu.memory_space<vmem>>, %arg6: memref<2x128x32xbf16, #tpu.memory_space<vmem>>, %arg7: memref<2x1x32xf32, #tpu.memory_space<vmem>>, %arg8: memref<128x128xbf16, #tpu.memory_space<vmem>>, %arg9: memref<256x128xf32, #tpu.memory_space<vmem>>) attributes {dimension_semantics = [#tpu.dimension_semantics<parallel>, #tpu.dimension_semantics<arbitrary>], iteration_bounds = array<i64: 1, 1>, scalar_prefetch = 0 : i64, scratch_operands = 1 : i64, tpu.core_type = #tpu.core_type<tc>, window_params = [{transform_indices = @transform_0, window_bounds = array<i64: 2, 128, 128>}, {transform_indices = @transform_1, window_bounds = array<i64: 128, 128>}, {transform_indices = @transform_2, window_bounds = array<i64: 128, 128>}, {pipeline_mode = #tpu.pipeline_mode<synchronous>, transform_indices = @transform_3, window_bounds = array<i64: 2, 128, 32>}, {pipeline_mode = #tpu.pipeline_mode<synchronous>, transform_indices = @transform_4, window_bounds = array<i64: 2, 128, 32>}, {pipeline_mode = #tpu.pipeline_mode<synchronous>, transform_indices = @transform_5, window_bounds = array<i64: 2, 1, 32>}, {transform_indices = @transform_6, window_bounds = array<i64: 128, 128>}]} {
    %c0_i32 = arith.constant 0 : i32
    %0 = arith.cmpi eq, %arg1, %c0_i32 : i32
    %1 = arith.extui %0 : i1 to i32
    %c0_i32_0 = arith.constant 0 : i32
    %2 = arith.cmpi ne, %1, %c0_i32_0 : i32
    scf.if %2 {
      %cst_11 = arith.constant 0.000000e+00 : f32
      %13 = vector.broadcast %cst_11 : f32 to vector<256x128xf32>
      %c0_12 = arith.constant 0 : index
      %c0_13 = arith.constant 0 : index
      %14 = vector.load %arg9[%c0_12, %c0_13] : memref<256x128xf32, #tpu.memory_space<vmem>>, vector<256x128xf32>
      tpu.vector_store %arg9[%c0_12, %c0_13], %13 {strides = array<i32>} : memref<256x128xf32, #tpu.memory_space<vmem>>, vector<256x128xf32>,
    } else {
    }
    %c0 = arith.constant 0 : index
    %c0_1 = arith.constant 0 : index
    %c0_2 = arith.constant 0 : index
    %3 = vector.load %arg2[%c0, %c0_1, %c0_2] : memref<2x128x128xbf16, #tpu.memory_space<vmem>>, vector<2x128x128xbf16>
    %4 = vector.shape_cast %3 : vector<2x128x128xbf16> to vector<256x128xbf16>
    %c0_3 = arith.constant 0 : index
    %c0_4 = arith.constant 0 : index
    %5 = vector.load %arg9[%c0_3, %c0_4] : memref<256x128xf32, #tpu.memory_space<vmem>>, vector<256x128xf32>
    %c0_5 = arith.constant 0 : index
    %c0_6 = arith.constant 0 : index
    %6 = vector.load %arg3[%c0_5, %c0_6] : memref<128x128xbf16, #tpu.memory_space<vmem>>, vector<128x128xbf16>
    %cst = arith.constant dense<0.000000e+00> : vector<256x128xf32>
    %7 = tpu.matmul %4, %6, %cst {dimension_numbers = #tpu.dot_dimension_numbers<[1], [0], [0], [1], [0, 0, 1, 1], [], []>} : vector<256x128xbf16>, vector<128x128xbf16>, vector<256x128xf32> -> vector<256x128xf32>
    %8 = arith.addf %5, %7 : vector<256x128xf32>
    %c0_7 = arith.constant 0 : index
    %c0_8 = arith.constant 0 : index
    %9 = vector.load %arg9[%c0_7, %c0_8] : memref<256x128xf32, #tpu.memory_space<vmem>>, vector<256x128xf32>
    tpu.vector_store %arg9[%c0_7, %c0_8], %8 {strides = array<i32>} : memref<256x128xf32, #tpu.memory_space<vmem>>, vector<256x128xf32>,
    %c0_i32_9 = arith.constant 0 : i32
    %10 = arith.cmpi eq, %arg1, %c0_i32_9 : i32
    %11 = arith.extui %10 : i1 to i32
    %c0_i32_10 = arith.constant 0 : i32
    %12 = arith.cmpi ne, %11, %c0_i32_10 : i32
    scf.if %12 {
      %c0_11 = arith.constant 0 : index
      %c0_12 = arith.constant 0 : index
      %13 = vector.load %arg4[%c0_11, %c0_12] : memref<128x128xbf16, #tpu.memory_space<vmem>>, vector<128x128xbf16>
      %c0_13 = arith.constant 0 : index
      %c0_14 = arith.constant 0 : index
      %14 = vector.load %arg9[%c0_13, %c0_14] : memref<256x128xf32, #tpu.memory_space<vmem>>, vector<128x128xf32>
      %15 = arith.truncf %14 : vector<128x128xf32> to vector<128x128xbf16>
      %c0_15 = arith.constant 0 : index
      %c0_16 = arith.constant 0 : index
      %c0_17 = arith.constant 0 : index
      %16 = vector.load %arg5[%c0_15, %c0_16, %c0_17] : memref<2x128x32xbf16, #tpu.memory_space<vmem>>, vector<1x128x32xbf16>
      %17 = vector.shape_cast %16 : vector<1x128x32xbf16> to vector<128x32xbf16>
      %cst_18 = arith.constant dense<0.000000e+00> : vector<128x32xf32>
      %18 = tpu.matmul %15, %17, %cst_18 {dimension_numbers = #tpu.dot_dimension_numbers<[1], [0], [0], [1], [0, 0, 1, 1], [], []>} : vector<128x128xbf16>, vector<128x32xbf16>, vector<128x32xf32> -> vector<128x32xf32>
      %c0_19 = arith.constant 0 : index
      %c0_20 = arith.constant 0 : index
      %c0_21 = arith.constant 0 : index
      %19 = vector.load %arg6[%c0_19, %c0_20, %c0_21] : memref<2x128x32xbf16, #tpu.memory_space<vmem>>, vector<1x128x32xbf16>
      %20 = vector.shape_cast %19 : vector<1x128x32xbf16> to vector<128x32xbf16>
      %cst_22 = arith.constant dense<0.000000e+00> : vector<128x32xf32>
      %21 = tpu.matmul %13, %20, %cst_22 {dimension_numbers = #tpu.dot_dimension_numbers<[1], [0], [0], [1], [0, 0, 1, 1], [], []>} : vector<128x128xbf16>, vector<128x32xbf16>, vector<128x32xf32> -> vector<128x32xf32>
      %22 = arith.addf %18, %21 : vector<128x32xf32>
      %c0_23 = arith.constant 0 : index
      %c0_24 = arith.constant 0 : index
      %c0_25 = arith.constant 0 : index
      %23 = vector.load %arg7[%c0_23, %c0_24, %c0_25] : memref<2x1x32xf32, #tpu.memory_space<vmem>>, vector<1x1x32xf32>
      %24 = vector.shape_cast %23 : vector<1x1x32xf32> to vector<1x32xf32>
      %25 = vector.broadcast %24 : vector<1x32xf32> to vector<128x32xf32>
      %26 = arith.addf %22, %25 : vector<128x32xf32>
      %cst_26 = arith.constant 0.000000e+00 : f32
      %27 = vector.broadcast %cst_26 : f32 to vector<128x32xf32>
      %28 = arith.maximumf %26, %27 : vector<128x32xf32>
      %c128 = arith.constant 128 : index
      %c0_27 = arith.constant 0 : index
      %29 = vector.load %arg9[%c128, %c0_27] : memref<256x128xf32, #tpu.memory_space<vmem>>, vector<128x128xf32>
      %30 = arith.truncf %29 : vector<128x128xf32> to vector<128x128xbf16>
      %c1 = arith.constant 1 : index
      %c0_28 = arith.constant 0 : index
      %c0_29 = arith.constant 0 : index
      %31 = vector.load %arg5[%c1, %c0_28, %c0_29] : memref<2x128x32xbf16, #tpu.memory_space<vmem>>, vector<1x128x32xbf16>
      %32 = vector.shape_cast %31 : vector<1x128x32xbf16> to vector<128x32xbf16>
      %cst_30 = arith.constant dense<0.000000e+00> : vector<128x32xf32>
      %33 = tpu.matmul %30, %32, %cst_30 {dimension_numbers = #tpu.dot_dimension_numbers<[1], [0], [0], [1], [0, 0, 1, 1], [], []>} : vector<128x128xbf16>, vector<128x32xbf16>, vector<128x32xf32> -> vector<128x32xf32>
      %c1_31 = arith.constant 1 : index
      %c0_32 = arith.constant 0 : index
      %c0_33 = arith.constant 0 : index
      %34 = vector.load %arg6[%c1_31, %c0_32, %c0_33] : memref<2x128x32xbf16, #tpu.memory_space<vmem>>, vector<1x128x32xbf16>
      %35 = vector.shape_cast %34 : vector<1x128x32xbf16> to vector<128x32xbf16>
      %cst_34 = arith.constant dense<0.000000e+00> : vector<128x32xf32>
      %36 = tpu.matmul %13, %35, %cst_34 {dimension_numbers = #tpu.dot_dimension_numbers<[1], [0], [0], [1], [0, 0, 1, 1], [], []>} : vector<128x128xbf16>, vector<128x32xbf16>, vector<128x32xf32> -> vector<128x32xf32>
      %37 = arith.addf %33, %36 : vector<128x32xf32>
      %c1_35 = arith.constant 1 : index
      %c0_36 = arith.constant 0 : index
      %c0_37 = arith.constant 0 : index
      %38 = vector.load %arg7[%c1_35, %c0_36, %c0_37] : memref<2x1x32xf32, #tpu.memory_space<vmem>>, vector<1x1x32xf32>
      %39 = vector.shape_cast %38 : vector<1x1x32xf32> to vector<1x32xf32>
      %40 = vector.broadcast %39 : vector<1x32xf32> to vector<128x32xf32>
      %41 = arith.addf %37, %40 : vector<128x32xf32>
      %cst_38 = arith.constant 0.000000e+00 : f32
      %42 = vector.broadcast %cst_38 : f32 to vector<128x32xf32>
      %43 = arith.maximumf %41, %42 : vector<128x32xf32>
      %44 = tpu.concatenate %28, %43 in 1 : vector<128x32xf32>, vector<128x32xf32> -> vector<128x64xf32>
      %cst_39 = arith.constant 0.000000e+00 : f32
      %45 = vector.broadcast %cst_39 : f32 to vector<128x64xf32>
      %46 = tpu.concatenate %44, %45 in 1 : vector<128x64xf32>, vector<128x64xf32> -> vector<128x128xf32>
      %47 = arith.truncf %46 : vector<128x128xf32> to vector<128x128xbf16>
      %c0_40 = arith.constant 0 : index
      %c0_41 = arith.constant 0 : index
      %48 = vector.load %arg8[%c0_40, %c0_41] : memref<128x128xbf16, #tpu.memory_space<vmem>>, vector<128x128xbf16>
      tpu.vector_store %arg8[%c0_40, %c0_41], %47 {strides = array<i32>} : memref<128x128xbf16, #tpu.memory_space<vmem>>, vector<128x128xbf16>,
    } else {
    }
    return
  }
  func.func @transform_0(%arg0: i32, %arg1: i32) -> (i32, i32, i32) {
    %c0_i32 = arith.constant 0 : i32
    %c0_i32_0 = arith.constant 0 : i32
    return %c0_i32, %arg0, %arg1 : i32, i32, i32
  }
  func.func @transform_1(%arg0: i32, %arg1: i32) -> (i32, i32) {
    %c0_i32 = arith.constant 0 : i32
    %c0_i32_0 = arith.constant 0 : i32
    return %arg1, %c0_i32 : i32, i32
  }
  func.func @transform_2(%arg0: i32, %arg1: i32) -> (i32, i32) {
    %c0_i32 = arith.constant 0 : i32
    %c0_i32_0 = arith.constant 0 : i32
    return %arg0, %c0_i32 : i32, i32
  }
  func.func @transform_3(%arg0: i32, %arg1: i32) -> (i32, i32, i32) {
    %c0_i32 = arith.constant 0 : i32
    %c0_i32_0 = arith.constant 0 : i32
    %c0_i32_1 = arith.constant 0 : i32
    %c0_i32_2 = arith.constant 0 : i32
    return %c0_i32, %c0_i32_0, %c0_i32_1 : i32, i32, i32
  }
  func.func @transform_4(%arg0: i32, %arg1: i32) -> (i32, i32, i32) {
    %c0_i32 = arith.constant 0 : i32
    %c0_i32_0 = arith.constant 0 : i32
    %c0_i32_1 = arith.constant 0 : i32
    %c0_i32_2 = arith.constant 0 : i32
    return %c0_i32, %c0_i32_0, %c0_i32_1 : i32, i32, i32
  }
  func.func @transform_5(%arg0: i32, %arg1: i32) -> (i32, i32, i32) {
    %c0_i32 = arith.constant 0 : i32
    %c0_i32_0 = arith.constant 0 : i32
    %c0_i32_1 = arith.constant 0 : i32
    %c0_i32_2 = arith.constant 0 : i32
    return %c0_i32, %c0_i32_0, %c0_i32_1 : i32, i32, i32
  }
  func.func @transform_6(%arg0: i32, %arg1: i32) -> (i32, i32) {
    %c0_i32 = arith.constant 0 : i32
    %c0_i32_0 = arith.constant 0 : i32
    return %arg0, %c0_i32 : i32, i32
  }
}

</mosaic_0001>

<llo_original>
// kernel: tpu_custom_call.1
$region0: #{tpu_custom_call.1}
  #allocation0 [shape = 'u32[]', space=smem, size = 0x4, offset = 0x4, fixed_abs, tag = 'smem constant byte address 0x4 - core index']
  #allocation1 [shape = 'u32[144,128]{1,0:T(1,128)}', space=vmem, size = 0x12000, scoped, tag = 'internal scratch']
  #allocation2 [shape = 'f32[256,128]{1,0:T(8,128)}', space=vmem, size = 0x20000, scoped, tag = 'scratch operand']
  %s0 = inlined_call_operand.vmem [shape: bf16[2,128,128], index: 0, kind: input, shape index: {}]
  %s1 = inlined_call_operand.vmem [shape: bf16[128,128], index: 1, kind: input, shape index: {}]
  %s2 = inlined_call_operand.vmem [shape: bf16[128,128], index: 2, kind: input, shape index: {}]
  %s3 = inlined_call_operand.vmem [shape: bf16[2,128,32], index: 3, kind: input, shape index: {}]
  %s4 = inlined_call_operand.vmem [shape: bf16[2,128,32], index: 4, kind: input, shape index: {}]
  %s5 = inlined_call_operand.vmem [shape: f32[2,1,32], index: 5, kind: input, shape index: {}]
  %s6 = inlined_call_operand.hbm [shape: bf16[128,128], index: 6, kind: output, shape index: {}]
  %s7 = sld [smem:[#allocation0]]
  $region42: #{tpu_custom_call.1} parent=0
    _
  %s9 = ssub.s32 1, %s7
  %s10 = scalar_select 0, %s9, %s7
  $region1: #{tpu_custom_call.1} parent=0
    #allocation3 [shape = 'u8[32768]{0}', space=vmem, size = 0x8000, scoped, tag = 'output window, operand 0, single buffered']
    #allocation4 [shape = 's32[1]{0}', space=sflag, size = 0x4, scoped, tag = 'scoped memory for tpu_custom_call.1']
    %11 = vsyncpa [#allocation4], 0
    // Predicated region
    $region2: #{tpu_custom_call.1} parent=1 // pred_check
      _
    $region3: #{tpu_custom_call.1} parent=1 // pred_check_branch
      %13 = sbr.rel (0) target = $region5
    $region4: #{tpu_custom_call.1} parent=1 // pred_region
      _
    $region5: #{tpu_custom_call.1} parent=1 // pred_fallthru
      _
    // Predicated region
    $region6: #{tpu_custom_call.1} parent=1 // pred_check
      _
    $region7: #{tpu_custom_call.1} parent=1 // pred_check_branch
      %15 = sbr.rel (0) target = $region9
    $region8: #{tpu_custom_call.1} parent=1 // pred_region
      _
    $region9: #{tpu_custom_call.1} parent=1 // pred_fallthru
      _
    // Predicated region
    $region10: #{tpu_custom_call.1} parent=1 // pred_check
      _
    $region11: #{tpu_custom_call.1} parent=1 // pred_check_branch
      %17 = sbr.rel (0) target = $region13
    $region12: #{tpu_custom_call.1} parent=1 // pred_region
      _
    $region13: #{tpu_custom_call.1} parent=1 // pred_fallthru
      _
    // Predicated region
    $region14: #{tpu_custom_call.1} parent=1 // pred_check
      _
    $region15: #{tpu_custom_call.1} parent=1 // pred_check_branch
      %19 = sbr.rel (0) target = $region17
    $region16: #{tpu_custom_call.1} parent=1 // pred_region
      _
    $region17: #{tpu_custom_call.1} parent=1 // pred_fallthru
      _
    // Predicated region
    $region18: #{tpu_custom_call.1} parent=1 // pred_check
      _
    $region19: #{tpu_custom_call.1} parent=1 // pred_check_branch
      %21 = sbr.rel (0) target = $region21
    $region20: #{tpu_custom_call.1} parent=1 // pred_region
      _
    $region21: #{tpu_custom_call.1} parent=1 // pred_fallthru
      _
    // Predicated region
    $region22: #{tpu_custom_call.1} parent=1 // pred_check
      _
    $region23: #{tpu_custom_call.1} parent=1 // pred_check_branch
      %23 = sbr.rel (0) target = $region25
    $region24: #{tpu_custom_call.1} parent=1 // pred_region
      _
    $region25: #{tpu_custom_call.1} parent=1 // pred_fallthru
      _
    %p25 = scmp.eq.s32.totalorder 0, 0
    // Predicated region
    $region26: #{tpu_custom_call.1} parent=1 // pred_check
      %p26 = pneg %p25
    $region27: #{tpu_custom_call.1} parent=1 // pred_check_branch
      %28 = sbr.rel (%p26) target = $region29
    $region28: #{tpu_custom_call.1} parent=1 // pred_region
      %29 = vst [vmem:[#allocation2] sm:$0xff] 0.0
      %30 = vst [vmem:[#allocation2 + $0x8] sm:$0xff] 0.0
      %31 = vst [vmem:[#allocation2 + $0x10] sm:$0xff] 0.0
      %32 = vst [vmem:[#allocation2 + $0x18] sm:$0xff] 0.0
      %33 = vst [vmem:[#allocation2 + $0x20] sm:$0xff] 0.0
      %34 = vst [vmem:[#allocation2 + $0x28] sm:$0xff] 0.0
      %35 = vst [vmem:[#allocation2 + $0x30] sm:$0xff] 0.0
      %36 = vst [vmem:[#allocation2 + $0x38] sm:$0xff] 0.0
      %37 = vst [vmem:[#allocation2 + $0x40] sm:$0xff] 0.0
      %38 = vst [vmem:[#allocation2 + $0x48] sm:$0xff] 0.0
      %39 = vst [vmem:[#allocation2 + $0x50] sm:$0xff] 0.0
      %40 = vst [vmem:[#allocation2 + $0x58] sm:$0xff] 0.0
      %41 = vst [vmem:[#allocation2 + $0x60] sm:$0xff] 0.0
      %42 = vst [vmem:[#allocation2 + $0x68] sm:$0xff] 0.0
      %43 = vst [vmem:[#allocation2 + $0x70] sm:$0xff] 0.0
      %44 = vst [vmem:[#allocation2 + $0x78] sm:$0xff] 0.0
      %45 = vst [vmem:[#allocation2 + $0x80] sm:$0xff] 0.0
      %46 = vst [vmem:[#allocation2 + $0x88] sm:$0xff] 0.0
      %47 = vst [vmem:[#allocation2 + $0x90] sm:$0xff] 0.0
      %48 = vst [vmem:[#allocation2 + $0x98] sm:$0xff] 0.0
      %49 = vst [vmem:[#allocation2 + $0xa0] sm:$0xff] 0.0
      %50 = vst [vmem:[#allocation2 + $0xa8] sm:$0xff] 0.0
      %51 = vst [vmem:[#allocation2 + $0xb0] sm:$0xff] 0.0
      %52 = vst [vmem:[#allocation2 + $0xb8] sm:$0xff] 0.0
      %53 = vst [vmem:[#allocation2 + $0xc0] sm:$0xff] 0.0
      %54 = vst [vmem:[#allocation2 + $0xc8] sm:$0xff] 0.0
      %55 = vst [vmem:[#allocation2 + $0xd0] sm:$0xff] 0.0
      %56 = vst [vmem:[#allocation2 + $0xd8] sm:$0xff] 0.0
      %57 = vst [vmem:[#allocation2 + $0xe0] sm:$0xff] 0.0
      %58 = vst [vmem:[#allocation2 + $0xe8] sm:$0xff] 0.0
      %59 = vst [vmem:[#allocation2 + $0xf0] sm:$0xff] 0.0
      %60 = vst [vmem:[#allocation2 + $0xf8] sm:$0xff] 0.0
    $region29: #{tpu_custom_call.1} parent=1 // pred_fallthru
      _
    %v61 = vld [vmem:[%s0] sm:$0xf]
    %v62 = vld [vmem:[%s0 + $0x4] sm:$0xf]
    %v63 = vld [vmem:[%s0 + $0x8] sm:$0xf]
    %v64 = vld [vmem:[%s0 + $0xc] sm:$0xf]
    %v65 = vld [vmem:[%s0 + $0x10] sm:$0xf]
    %v66 = vld [vmem:[%s0 + $0x14] sm:$0xf]
    %v67 = vld [vmem:[%s0 + $0x18] sm:$0xf]
    %v68 = vld [vmem:[%s0 + $0x1c] sm:$0xf]
    %v69 = vld [vmem:[%s0 + $0x20] sm:$0xf]
    %v70 = vld [vmem:[%s0 + $0x24] sm:$0xf]
    %v71 = vld [vmem:[%s0 + $0x28] sm:$0xf]
    %v72 = vld [vmem:[%s0 + $0x2c] sm:$0xf]
    %v73 = vld [vmem:[%s0 + $0x30] sm:$0xf]
    %v74 = vld [vmem:[%s0 + $0x34] sm:$0xf]
    %v75 = vld [vmem:[%s0 + $0x38] sm:$0xf]
    %v76 = vld [vmem:[%s0 + $0x3c] sm:$0xf]
    %v77 = vld [vmem:[%s0 + $0x40] sm:$0xf]
    %v78 = vld [vmem:[%s0 + $0x44] sm:$0xf]
    %v79 = vld [vmem:[%s0 + $0x48] sm:$0xf]
    %v80 = vld [vmem:[%s0 + $0x4c] sm:$0xf]
    %v81 = vld [vmem:[%s0 + $0x50] sm:$0xf]
    %v82 = vld [vmem:[%s0 + $0x54] sm:$0xf]
    %v83 = vld [vmem:[%s0 + $0x58] sm:$0xf]
    %v84 = vld [vmem:[%s0 + $0x5c] sm:$0xf]
    %v85 = vld [vmem:[%s0 + $0x60] sm:$0xf]
    %v86 = vld [vmem:[%s0 + $0x64] sm:$0xf]
    %v87 = vld [vmem:[%s0 + $0x68] sm:$0xf]
    %v88 = vld [vmem:[%s0 + $0x6c] sm:$0xf]
    %v89 = vld [vmem:[%s0 + $0x70] sm:$0xf]
    %v90 = vld [vmem:[%s0 + $0x74] sm:$0xf]
    %v91 = vld [vmem:[%s0 + $0x78] sm:$0xf]
    %v92 = vld [vmem:[%s0 + $0x7c] sm:$0xf]
    %v93 = vld [vmem:[#allocation2] sm:$0xff]
    %v94 = vld [vmem:[#allocation2 + $0x8] sm:$0xff]
    %v95 = vld [vmem:[#allocation2 + $0x10] sm:$0xff]
    %v96 = vld [vmem:[#allocation2 + $0x18] sm:$0xff]
    %v97 = vld [vmem:[#allocation2 + $0x20] sm:$0xff]
    %v98 = vld [vmem:[#allocation2 + $0x28] sm:$0xff]
    %v99 = vld [vmem:[#allocation2 + $0x30] sm:$0xff]
    %v100 = vld [vmem:[#allocation2 + $0x38] sm:$0xff]
    %v101 = vld [vmem:[#allocation2 + $0x40] sm:$0xff]
    %v102 = vld [vmem:[#allocation2 + $0x48] sm:$0xff]
    %v103 = vld [vmem:[#allocation2 + $0x50] sm:$0xff]
    %v104 = vld [vmem:[#allocation2 + $0x58] sm:$0xff]
    %v105 = vld [vmem:[#allocation2 + $0x60] sm:$0xff]
    %v106 = vld [vmem:[#allocation2 + $0x68] sm:$0xff]
    %v107 = vld [vmem:[#allocation2 + $0x70] sm:$0xff]
    %v108 = vld [vmem:[#allocation2 + $0x78] sm:$0xff]
    %v109 = vld [vmem:[#allocation2 + $0x80] sm:$0xff]
    %v110 = vld [vmem:[#allocation2 + $0x88] sm:$0xff]
    %v111 = vld [vmem:[#allocation2 + $0x90] sm:$0xff]
    %v112 = vld [vmem:[#allocation2 + $0x98] sm:$0xff]
    %v113 = vld [vmem:[#allocation2 + $0xa0] sm:$0xff]
    %v114 = vld [vmem:[#allocation2 + $0xa8] sm:$0xff]
    %v115 = vld [vmem:[#allocation2 + $0xb0] sm:$0xff]
    %v116 = vld [vmem:[#allocation2 + $0xb8] sm:$0xff]
    %v117 = vld [vmem:[#allocation2 + $0xc0] sm:$0xff]
    %v118 = vld [vmem:[#allocation2 + $0xc8] sm:$0xff]
    %v119 = vld [vmem:[#allocation2 + $0xd0] sm:$0xff]
    %v120 = vld [vmem:[#allocation2 + $0xd8] sm:$0xff]
    %v121 = vld [vmem:[#allocation2 + $0xe0] sm:$0xff]
    %v122 = vld [vmem:[#allocation2 + $0xe8] sm:$0xff]
    %v123 = vld [vmem:[#allocation2 + $0xf0] sm:$0xff]
    %v124 = vld [vmem:[#allocation2 + $0xf8] sm:$0xff]
    %v125 = vld [vmem:[%s1] sm:$0xf]
    %v126 = vld [vmem:[%s1 + $0x4] sm:$0xf]
    %v127 = vld [vmem:[%s1 + $0x8] sm:$0xf]
    %v128 = vld [vmem:[%s1 + $0xc] sm:$0xf]
    %v129 = vld [vmem:[%s1 + $0x10] sm:$0xf]
    %v130 = vld [vmem:[%s1 + $0x14] sm:$0xf]
    %v131 = vld [vmem:[%s1 + $0x18] sm:$0xf]
    %v132 = vld [vmem:[%s1 + $0x1c] sm:$0xf]
    %v133 = vld [vmem:[%s1 + $0x20] sm:$0xf]
    %v134 = vld [vmem:[%s1 + $0x24] sm:$0xf]
    %v135 = vld [vmem:[%s1 + $0x28] sm:$0xf]
    %v136 = vld [vmem:[%s1 + $0x2c] sm:$0xf]
    %v137 = vld [vmem:[%s1 + $0x30] sm:$0xf]
    %v138 = vld [vmem:[%s1 + $0x34] sm:$0xf]
    %v139 = vld [vmem:[%s1 + $0x38] sm:$0xf]
    %v140 = vld [vmem:[%s1 + $0x3c] sm:$0xf]
    %v173 = vunpack.c.l.b16 %v61
    %v174 = vunpack.c.l.b16 %v62
    %v175 = vunpack.c.l.b16 %v63
    %v176 = vunpack.c.l.b16 %v64
    %v177 = vunpack.c.l.b16 %v65
    %v178 = vunpack.c.l.b16 %v66
    %v179 = vunpack.c.l.b16 %v67
    %v180 = vunpack.c.l.b16 %v68
    %v181 = vunpack.c.l.b16 %v69
    %v182 = vunpack.c.l.b16 %v70
    %v183 = vunpack.c.l.b16 %v71
    %v184 = vunpack.c.l.b16 %v72
    %v185 = vunpack.c.l.b16 %v73
    %v186 = vunpack.c.l.b16 %v74
    %v187 = vunpack.c.l.b16 %v75
    %v188 = vunpack.c.l.b16 %v76
    %v189 = vunpack.c.l.b16 %v77
    %v190 = vunpack.c.l.b16 %v78
    %v191 = vunpack.c.l.b16 %v79
    %v192 = vunpack.c.l.b16 %v80
    %v193 = vunpack.c.l.b16 %v81
    %v194 = vunpack.c.l.b16 %v82
    %v195 = vunpack.c.l.b16 %v83
    %v196 = vunpack.c.l.b16 %v84
    %v197 = vunpack.c.l.b16 %v85
    %v198 = vunpack.c.l.b16 %v86
    %v199 = vunpack.c.l.b16 %v87
    %v200 = vunpack.c.l.b16 %v88
    %v201 = vunpack.c.l.b16 %v89
    %v202 = vunpack.c.l.b16 %v90
    %v203 = vunpack.c.l.b16 %v91
    %v204 = vunpack.c.l.b16 %v92
    %v205 = vpack.c.b16 %v174, %v173
    %v206 = vpack.c.b16 %v176, %v175
    %v207 = vpack.c.b16 %v178, %v177
    %v208 = vpack.c.b16 %v180, %v179
    %v209 = vpack.c.b16 %v182, %v181
    %v210 = vpack.c.b16 %v184, %v183
    %v211 = vpack.c.b16 %v186, %v185
    %v212 = vpack.c.b16 %v188, %v187
    %v213 = vpack.c.b16 %v190, %v189
    %v214 = vpack.c.b16 %v192, %v191
    %v215 = vpack.c.b16 %v194, %v193
    %v216 = vpack.c.b16 %v196, %v195
    %v217 = vpack.c.b16 %v198, %v197
    %v218 = vpack.c.b16 %v200, %v199
    %v219 = vpack.c.b16 %v202, %v201
    %v220 = vpack.c.b16 %v204, %v203
    %v253 = vunpack.c.l.b16 %v125
    %v254 = vunpack.c.l.b16 %v126
    %v255 = vunpack.c.l.b16 %v127
    %v256 = vunpack.c.l.b16 %v128
    %v257 = vunpack.c.l.b16 %v129
    %v258 = vunpack.c.l.b16 %v130
    %v259 = vunpack.c.l.b16 %v131
    %v260 = vunpack.c.l.b16 %v132
    %v261 = vunpack.c.l.b16 %v133
    %v262 = vunpack.c.l.b16 %v134
    %v263 = vunpack.c.l.b16 %v135
    %v264 = vunpack.c.l.b16 %v136
    %v265 = vunpack.c.l.b16 %v137
    %v266 = vunpack.c.l.b16 %v138
    %v267 = vunpack.c.l.b16 %v139
    %v268 = vunpack.c.l.b16 %v140
    %v269 = vpack.c.b16 %v254, %v253
    %v270 = vpack.c.b16 %v256, %v255
    %v271 = vpack.c.b16 %v258, %v257
    %v272 = vpack.c.b16 %v260, %v259
    %v273 = vpack.c.b16 %v262, %v261
    %v274 = vpack.c.b16 %v264, %v263
    %v275 = vpack.c.b16 %v266, %v265
    %v276 = vpack.c.b16 %v268, %v267
    %285 = vmatprep.subr.bf16.mxu0 0
    %286 = vmatpush1.bf16.msra.mxu0 %v269
    %287 = vmatprep.subr.bf16.mxu0 0
    %288 = vmatpush1.bf16.msra.mxu0 %v270
    %289 = vmatprep.subr.bf16.mxu0 0
    %290 = vmatpush1.bf16.msra.mxu0 %v271
    %291 = vmatprep.subr.bf16.mxu0 0
    %292 = vmatpush1.bf16.msra.mxu0 %v272
    %293 = vmatprep.subr.bf16.mxu0 0
    %294 = vmatpush1.bf16.msra.mxu0 %v273
    %295 = vmatprep.subr.bf16.mxu0 0
    %296 = vmatpush1.bf16.msra.mxu0 %v274
    %297 = vmatprep.subr.bf16.mxu0 0
    %298 = vmatpush1.bf16.msra.mxu0 %v275
    %299 = vmatprep.subr.bf16.mxu0 0
    %300 = vmatpush1.bf16.msra.mxu0 %v276
    %301 = vmatprep.subr.bf16.mxu0 0
    %302 = vmatpush1.bf16.msra.mxu0 0
    %303 = vmatprep.subr.bf16.mxu0 0
    %304 = vmatpush1.bf16.msra.mxu0 0
    %305 = vmatprep.subr.bf16.mxu0 0
    %306 = vmatpush1.bf16.msra.mxu0 0
    %307 = vmatprep.subr.bf16.mxu0 0
    %308 = vmatpush1.bf16.msra.mxu0 0
    %309 = vmatprep.subr.bf16.mxu0 0
    %310 = vmatpush1.bf16.msra.mxu0 0
    %311 = vmatprep.subr.bf16.mxu0 0
    %312 = vmatpush1.bf16.msra.mxu0 0
    %313 = vmatprep.subr.bf16.mxu0 0
    %314 = vmatpush1.bf16.msra.mxu0 0
    %315 = vmatprep.subr.bf16.mxu0 0
    %316 = vmatpush1.bf16.msra.mxu0 0
    %317 = vmatprep.mubr.bf16.mxu0 0
    %318 = vmatmul.mubr.bf16.gmra.mrb[0].mxu0 %v205
    %v319 = vpop.f32.mrb[0].mxu0
    %v320 = vadd.f32 0.0, %v319
    %v321 = vpop.f32.mrb[0].mxu0
    %v322 = vpop.f32.mrb[0].mxu0
    %v323 = vadd.f32 0.0, %v322
    %v324 = vpop.f32.mrb[0].mxu0
    %325 = vmatprep.mubr.bf16.mxu0 0
    %326 = vmatmul.mubr.bf16.gmra.mrb[0].mxu0 %v206
    %v327 = vpop.f32.mrb[0].mxu0
    %v328 = vadd.f32 0.0, %v327
    %v329 = vpop.f32.mrb[0].mxu0
    %v330 = vpop.f32.mrb[0].mxu0
    %v331 = vadd.f32 0.0, %v330
    %v332 = vpop.f32.mrb[0].mxu0
    %333 = vmatprep.mubr.bf16.mxu0 0
    %334 = vmatmul.mubr.bf16.gmra.mrb[0].mxu0 %v207
    %v335 = vpop.f32.mrb[0].mxu0
    %v336 = vadd.f32 0.0, %v335
    %v337 = vpop.f32.mrb[0].mxu0
    %v338 = vpop.f32.mrb[0].mxu0
    %v339 = vadd.f32 0.0, %v338
    %v340 = vpop.f32.mrb[0].mxu0
    %341 = vmatprep.mubr.bf16.mxu0 0
    %342 = vmatmul.mubr.bf16.gmra.mrb[0].mxu0 %v208
    %v343 = vpop.f32.mrb[0].mxu0
    %v344 = vadd.f32 0.0, %v343
    %v345 = vpop.f32.mrb[0].mxu0
    %v346 = vpop.f32.mrb[0].mxu0
    %v347 = vadd.f32 0.0, %v346
    %v348 = vpop.f32.mrb[0].mxu0
    %349 = vmatprep.mubr.bf16.mxu0 0
    %350 = vmatmul.mubr.bf16.gmra.mrb[0].mxu0 %v209
    %v351 = vpop.f32.mrb[0].mxu0
    %v352 = vadd.f32 0.0, %v351
    %v353 = vpop.f32.mrb[0].mxu0
    %v354 = vpop.f32.mrb[0].mxu0
    %v355 = vadd.f32 0.0, %v354
    %v356 = vpop.f32.mrb[0].mxu0
    %357 = vmatprep.mubr.bf16.mxu0 0
    %358 = vmatmul.mubr.bf16.gmra.mrb[0].mxu0 %v210
    %v359 = vpop.f32.mrb[0].mxu0
    %v360 = vadd.f32 0.0, %v359
    %v361 = vpop.f32.mrb[0].mxu0
    %v362 = vpop.f32.mrb[0].mxu0
    %v363 = vadd.f32 0.0, %v362
    %v364 = vpop.f32.mrb[0].mxu0
    %365 = vmatprep.mubr.bf16.mxu0 0
    %366 = vmatmul.mubr.bf16.gmra.mrb[0].mxu0 %v211
    %v367 = vpop.f32.mrb[0].mxu0
    %v368 = vadd.f32 0.0, %v367
    %v369 = vpop.f32.mrb[0].mxu0
    %v370 = vpop.f32.mrb[0].mxu0
    %v371 = vadd.f32 0.0, %v370
    %v372 = vpop.f32.mrb[0].mxu0
    %373 = vmatprep.mubr.bf16.mxu0 0
    %374 = vmatmul.mubr.bf16.gmra.mrb[0].mxu0 %v212
    %v375 = vpop.f32.mrb[0].mxu0
    %v376 = vadd.f32 0.0, %v375
    %v377 = vpop.f32.mrb[0].mxu0
    %v378 = vpop.f32.mrb[0].mxu0
    %v379 = vadd.f32 0.0, %v378
    %v380 = vpop.f32.mrb[0].mxu0
    %381 = vmatprep.mubr.bf16.mxu0 0
    %382 = vmatmul.mubr.bf16.gmra.mrb[0].mxu0 %v213
    %v383 = vpop.f32.mrb[0].mxu0
    %v384 = vadd.f32 0.0, %v383
    %v385 = vpop.f32.mrb[0].mxu0
    %v386 = vpop.f32.mrb[0].mxu0
    %v387 = vadd.f32 0.0, %v386
    %v388 = vpop.f32.mrb[0].mxu0
    %389 = vmatprep.mubr.bf16.mxu0 0
    %390 = vmatmul.mubr.bf16.gmra.mrb[0].mxu0 %v214
    %v391 = vpop.f32.mrb[0].mxu0
    %v392 = vadd.f32 0.0, %v391
    %v393 = vpop.f32.mrb[0].mxu0
    %v394 = vpop.f32.mrb[0].mxu0
    %v395 = vadd.f32 0.0, %v394
    %v396 = vpop.f32.mrb[0].mxu0
    %397 = vmatprep.mubr.bf16.mxu0 0
    %398 = vmatmul.mubr.bf16.gmra.mrb[0].mxu0 %v215
    %v399 = vpop.f32.mrb[0].mxu0
    %v400 = vadd.f32 0.0, %v399
    %v401 = vpop.f32.mrb[0].mxu0
    %v402 = vpop.f32.mrb[0].mxu0
    %v403 = vadd.f32 0.0, %v402
    %v404 = vpop.f32.mrb[0].mxu0
    %405 = vmatprep.mubr.bf16.mxu0 0
    %406 = vmatmul.mubr.bf16.gmra.mrb[0].mxu0 %v216
    %v407 = vpop.f32.mrb[0].mxu0
    %v408 = vadd.f32 0.0, %v407
    %v409 = vpop.f32.mrb[0].mxu0
    %v410 = vpop.f32.mrb[0].mxu0
    %v411 = vadd.f32 0.0, %v410
    %v412 = vpop.f32.mrb[0].mxu0
    %413 = vmatprep.mubr.bf16.mxu0 0
    %414 = vmatmul.mubr.bf16.gmra.mrb[0].mxu0 %v217
    %v415 = vpop.f32.mrb[0].mxu0
    %v416 = vadd.f32 0.0, %v415
    %v417 = vpop.f32.mrb[0].mxu0
    %v418 = vpop.f32.mrb[0].mxu0
    %v419 = vadd.f32 0.0, %v418
    %v420 = vpop.f32.mrb[0].mxu0
    %421 = vmatprep.mubr.bf16.mxu0 0
    %422 = vmatmul.mubr.bf16.gmra.mrb[0].mxu0 %v218
    %v423 = vpop.f32.mrb[0].mxu0
    %v424 = vadd.f32 0.0, %v423
    %v425 = vpop.f32.mrb[0].mxu0
    %v426 = vpop.f32.mrb[0].mxu0
    %v427 = vadd.f32 0.0, %v426
    %v428 = vpop.f32.mrb[0].mxu0
    %429 = vmatprep.mubr.bf16.mxu0 0
    %430 = vmatmul.mubr.bf16.gmra.mrb[0].mxu0 %v219
    %v431 = vpop.f32.mrb[0].mxu0
    %v432 = vadd.f32 0.0, %v431
    %v433 = vpop.f32.mrb[0].mxu0
    %v434 = vpop.f32.mrb[0].mxu0
    %v435 = vadd.f32 0.0, %v434
    %v436 = vpop.f32.mrb[0].mxu0
    %437 = vmatprep.mubr.bf16.mxu0 0
    %438 = vmatmul.mubr.bf16.gmra.mrb[0].mxu0 %v220
    %v439 = vpop.f32.mrb[0].mxu0
    %v440 = vadd.f32 0.0, %v439
    %v441 = vpop.f32.mrb[0].mxu0
    %v442 = vpop.f32.mrb[0].mxu0
    %v443 = vadd.f32 0.0, %v442
    %v444 = vpop.f32.mrb[0].mxu0
    %445 = vdwg.mxu0
    %v446 = vadd.f32 %v93, %v320
    %v447 = vadd.f32 %v94, %v323
    %v448 = vadd.f32 %v95, %v328
    %v449 = vadd.f32 %v96, %v331
    %v450 = vadd.f32 %v97, %v336
    %v451 = vadd.f32 %v98, %v339
    %v452 = vadd.f32 %v99, %v344
    %v453 = vadd.f32 %v100, %v347
    %v454 = vadd.f32 %v101, %v352
    %v455 = vadd.f32 %v102, %v355
    %v456 = vadd.f32 %v103, %v360
    %v457 = vadd.f32 %v104, %v363
    %v458 = vadd.f32 %v105, %v368
    %v459 = vadd.f32 %v106, %v371
    %v460 = vadd.f32 %v107, %v376
    %v461 = vadd.f32 %v108, %v379
    %v462 = vadd.f32 %v109, %v384
    %v463 = vadd.f32 %v110, %v387
    %v464 = vadd.f32 %v111, %v392
    %v465 = vadd.f32 %v112, %v395
    %v466 = vadd.f32 %v113, %v400
    %v467 = vadd.f32 %v114, %v403
    %v468 = vadd.f32 %v115, %v408
    %v469 = vadd.f32 %v116, %v411
    %v470 = vadd.f32 %v117, %v416
    %v471 = vadd.f32 %v118, %v419
    %v472 = vadd.f32 %v119, %v424
    %v473 = vadd.f32 %v120, %v427
    %v474 = vadd.f32 %v121, %v432
    %v475 = vadd.f32 %v122, %v435
    %v476 = vadd.f32 %v123, %v440
    %v477 = vadd.f32 %v124, %v443
    %478 = vst [vmem:[#allocation2] sm:$0xff] %v446
    %479 = vst [vmem:[#allocation2 + $0x8] sm:$0xff] %v447
    %480 = vst [vmem:[#allocation2 + $0x10] sm:$0xff] %v448
    %481 = vst [vmem:[#allocation2 + $0x18] sm:$0xff] %v449
    %482 = vst [vmem:[#allocation2 + $0x20] sm:$0xff] %v450
    %483 = vst [vmem:[#allocation2 + $0x28] sm:$0xff] %v451
    %484 = vst [vmem:[#allocation2 + $0x30] sm:$0xff] %v452
    %485 = vst [vmem:[#allocation2 + $0x38] sm:$0xff] %v453
    %486 = vst [vmem:[#allocation2 + $0x40] sm:$0xff] %v454
    %487 = vst [vmem:[#allocation2 + $0x48] sm:$0xff] %v455
    %488 = vst [vmem:[#allocation2 + $0x50] sm:$0xff] %v456
    %489 = vst [vmem:[#allocation2 + $0x58] sm:$0xff] %v457
    %490 = vst [vmem:[#allocation2 + $0x60] sm:$0xff] %v458
    %491 = vst [vmem:[#allocation2 + $0x68] sm:$0xff] %v459
    %492 = vst [vmem:[#allocation2 + $0x70] sm:$0xff] %v460
    %493 = vst [vmem:[#allocation2 + $0x78] sm:$0xff] %v461
    %494 = vst [vmem:[#allocation2 + $0x80] sm:$0xff] %v462
    %495 = vst [vmem:[#allocation2 + $0x88] sm:$0xff] %v463
    %496 = vst [vmem:[#allocation2 + $0x90] sm:$0xff] %v464
    %497 = vst [vmem:[#allocation2 + $0x98] sm:$0xff] %v465
    %498 = vst [vmem:[#allocation2 + $0xa0] sm:$0xff] %v466
    %499 = vst [vmem:[#allocation2 + $0xa8] sm:$0xff] %v467
    %500 = vst [vmem:[#allocation2 + $0xb0] sm:$0xff] %v468
    %501 = vst [vmem:[#allocation2 + $0xb8] sm:$0xff] %v469
    %502 = vst [vmem:[#allocation2 + $0xc0] sm:$0xff] %v470
    %503 = vst [vmem:[#allocation2 + $0xc8] sm:$0xff] %v471
    %504 = vst [vmem:[#allocation2 + $0xd0] sm:$0xff] %v472
    %505 = vst [vmem:[#allocation2 + $0xd8] sm:$0xff] %v473
    %506 = vst [vmem:[#allocation2 + $0xe0] sm:$0xff] %v474
    %507 = vst [vmem:[#allocation2 + $0xe8] sm:$0xff] %v475
    %508 = vst [vmem:[#allocation2 + $0xf0] sm:$0xff] %v476
    %509 = vst [vmem:[#allocation2 + $0xf8] sm:$0xff] %v477
    // Predicated region
    $region30: #{tpu_custom_call.1} parent=1 // pred_check
      %p510 = pneg %p25
    $region31: #{tpu_custom_call.1} parent=1 // pred_check_branch
      %512 = sbr.rel (%p510) target = $region33
    $region32: #{tpu_custom_call.1} parent=1 // pred_region
      %v513 = vld [vmem:[%s2] sm:$0xf]
      %v514 = vld [vmem:[%s2 + $0x4] sm:$0xf]
      %v515 = vld [vmem:[%s2 + $0x8] sm:$0xf]
      %v516 = vld [vmem:[%s2 + $0xc] sm:$0xf]
      %v517 = vld [vmem:[%s2 + $0x10] sm:$0xf]
      %v518 = vld [vmem:[%s2 + $0x14] sm:$0xf]
      %v519 = vld [vmem:[%s2 + $0x18] sm:$0xf]
      %v520 = vld [vmem:[%s2 + $0x1c] sm:$0xf]
      %v521 = vld [vmem:[%s2 + $0x20] sm:$0xf]
      %v522 = vld [vmem:[%s2 + $0x24] sm:$0xf]
      %v523 = vld [vmem:[%s2 + $0x28] sm:$0xf]
      %v524 = vld [vmem:[%s2 + $0x2c] sm:$0xf]
      %v525 = vld [vmem:[%s2 + $0x30] sm:$0xf]
      %v526 = vld [vmem:[%s2 + $0x34] sm:$0xf]
      %v527 = vld [vmem:[%s2 + $0x38] sm:$0xf]
      %v528 = vld [vmem:[%s2 + $0x3c] sm:$0xf]
      %v529 = vld [vmem:[#allocation2] sm:$0xff]
      %v530 = vld [vmem:[#allocation2 + $0x8] sm:$0xff]
      %v531 = vld [vmem:[#allocation2 + $0x10] sm:$0xff]
      %v532 = vld [vmem:[#allocation2 + $0x18] sm:$0xff]
      %v533 = vld [vmem:[#allocation2 + $0x20] sm:$0xff]
      %v534 = vld [vmem:[#allocation2 + $0x28] sm:$0xff]
      %v535 = vld [vmem:[#allocation2 + $0x30] sm:$0xff]
      %v536 = vld [vmem:[#allocation2 + $0x38] sm:$0xff]
      %v537 = vld [vmem:[#allocation2 + $0x40] sm:$0xff]
      %v538 = vld [vmem:[#allocation2 + $0x48] sm:$0xff]
      %v539 = vld [vmem:[#allocation2 + $0x50] sm:$0xff]
      %v540 = vld [vmem:[#allocation2 + $0x58] sm:$0xff]
      %v541 = vld [vmem:[#allocation2 + $0x60] sm:$0xff]
      %v542 = vld [vmem:[#allocation2 + $0x68] sm:$0xff]
      %v543 = vld [vmem:[#allocation2 + $0x70] sm:$0xff]
      %v544 = vld [vmem:[#allocation2 + $0x78] sm:$0xff]
      %v545 = vpack.c.bf16 %v530, %v529
      %v546 = vpack.c.bf16 %v532, %v531
      %v547 = vpack.c.bf16 %v534, %v533
      %v548 = vpack.c.bf16 %v536, %v535
      %v549 = vpack.c.bf16 %v538, %v537
      %v550 = vpack.c.bf16 %v540, %v539
      %v551 = vpack.c.bf16 %v542, %v541
      %v552 = vpack.c.bf16 %v544, %v543
      %v553 = vld [vmem:[%s3] sm:$0xf]
      %v554 = vld [vmem:[%s3 + $0x4] sm:$0xf]
      %v555 = vld [vmem:[%s3 + $0x8] sm:$0xf]
      %v556 = vld [vmem:[%s3 + $0xc] sm:$0xf]
      %v557 = vld [vmem:[%s3 + $0x10] sm:$0xf]
      %v558 = vld [vmem:[%s3 + $0x14] sm:$0xf]
      %v559 = vld [vmem:[%s3 + $0x18] sm:$0xf]
      %v560 = vld [vmem:[%s3 + $0x1c] sm:$0xf]
      %v561 = vld [vmem:[%s3 + $0x20] sm:$0xf]
      %v562 = vld [vmem:[%s3 + $0x24] sm:$0xf]
      %v563 = vld [vmem:[%s3 + $0x28] sm:$0xf]
      %v564 = vld [vmem:[%s3 + $0x2c] sm:$0xf]
      %v565 = vld [vmem:[%s3 + $0x30] sm:$0xf]
      %v566 = vld [vmem:[%s3 + $0x34] sm:$0xf]
      %v567 = vld [vmem:[%s3 + $0x38] sm:$0xf]
      %v568 = vld [vmem:[%s3 + $0x3c] sm:$0xf]
      %v569 = vld [vmem:[%s4] sm:$0xf]
      %v570 = vld [vmem:[%s4 + $0x4] sm:$0xf]
      %v571 = vld [vmem:[%s4 + $0x8] sm:$0xf]
      %v572 = vld [vmem:[%s4 + $0xc] sm:$0xf]
      %v573 = vld [vmem:[%s4 + $0x10] sm:$0xf]
      %v574 = vld [vmem:[%s4 + $0x14] sm:$0xf]
      %v575 = vld [vmem:[%s4 + $0x18] sm:$0xf]
      %v576 = vld [vmem:[%s4 + $0x1c] sm:$0xf]
      %v577 = vld [vmem:[%s4 + $0x20] sm:$0xf]
      %v578 = vld [vmem:[%s4 + $0x24] sm:$0xf]
      %v579 = vld [vmem:[%s4 + $0x28] sm:$0xf]
      %v580 = vld [vmem:[%s4 + $0x2c] sm:$0xf]
      %v581 = vld [vmem:[%s4 + $0x30] sm:$0xf]
      %v582 = vld [vmem:[%s4 + $0x34] sm:$0xf]
      %v583 = vld [vmem:[%s4 + $0x38] sm:$0xf]
      %v584 = vld [vmem:[%s4 + $0x3c] sm:$0xf]
      %v601 = vunpack.c.l.b16 %v513
      %v602 = vunpack.c.l.b16 %v514
      %v603 = vunpack.c.l.b16 %v515
      %v604 = vunpack.c.l.b16 %v516
      %v605 = vunpack.c.l.b16 %v517
      %v606 = vunpack.c.l.b16 %v518
      %v607 = vunpack.c.l.b16 %v519
      %v608 = vunpack.c.l.b16 %v520
      %v609 = vunpack.c.l.b16 %v521
      %v610 = vunpack.c.l.b16 %v522
      %v611 = vunpack.c.l.b16 %v523
      %v612 = vunpack.c.l.b16 %v524
      %v613 = vunpack.c.l.b16 %v525
      %v614 = vunpack.c.l.b16 %v526
      %v615 = vunpack.c.l.b16 %v527
      %v616 = vunpack.c.l.b16 %v528
      %v617 = vpack.c.b16 %v602, %v601
      %v618 = vpack.c.b16 %v604, %v603
      %v619 = vpack.c.b16 %v606, %v605
      %v620 = vpack.c.b16 %v608, %v607
      %v621 = vpack.c.b16 %v610, %v609
      %v622 = vpack.c.b16 %v612, %v611
      %v623 = vpack.c.b16 %v614, %v613
      %v624 = vpack.c.b16 %v616, %v615
      %v649 = vunpack.c.l.b16 %v569
      %v650 = vunpack.c.l.b16 %v570
      %v651 = vunpack.c.l.b16 %v571
      %v652 = vunpack.c.l.b16 %v572
      %v653 = vunpack.c.l.b16 %v573
      %v654 = vunpack.c.l.b16 %v574
      %v655 = vunpack.c.l.b16 %v575
      %v656 = vunpack.c.l.b16 %v576
      %v657 = vunpack.c.l.b16 %v577
      %v658 = vunpack.c.l.b16 %v578
      %v659 = vunpack.c.l.b16 %v579
      %v660 = vunpack.c.l.b16 %v580
      %v661 = vunpack.c.l.b16 %v581
      %v662 = vunpack.c.l.b16 %v582
      %v663 = vunpack.c.l.b16 %v583
      %v664 = vunpack.c.l.b16 %v584
      %v665 = vpack.c.b16 %v650, %v649
      %v666 = vpack.c.b16 %v652, %v651
      %v667 = vpack.c.b16 %v654, %v653
      %v668 = vpack.c.b16 %v656, %v655
      %v669 = vpack.c.b16 %v658, %v657
      %v670 = vpack.c.b16 %v660, %v659
      %v671 = vpack.c.b16 %v662, %v661
      %v672 = vpack.c.b16 %v664, %v663
      %681 = vmatprep.subr.bf16.mxu0 0
      %682 = vmatpush1.bf16.msra.mxu0 %v665
      %683 = vmatprep.subr.bf16.mxu0 0
      %684 = vmatpush1.bf16.msra.mxu0 %v666
      %685 = vmatprep.subr.bf16.mxu0 0
      %686 = vmatpush1.bf16.msra.mxu0 %v667
      %687 = vmatprep.subr.bf16.mxu0 0
      %688 = vmatpush1.bf16.msra.mxu0 %v668
      %689 = vmatprep.subr.bf16.mxu0 0
      %690 = vmatpush1.bf16.msra.mxu0 %v669
      %691 = vmatprep.subr.bf16.mxu0 0
      %692 = vmatpush1.bf16.msra.mxu0 %v670
      %693 = vmatprep.subr.bf16.mxu0 0
      %694 = vmatpush1.bf16.msra.mxu0 %v671
      %695 = vmatprep.subr.bf16.mxu0 0
      %696 = vmatpush1.bf16.msra.mxu0 %v672
      %697 = vmatprep.subr.bf16.mxu0 0
      %698 = vmatpush1.bf16.msra.mxu0 0
      %699 = vmatprep.subr.bf16.mxu0 0
      %700 = vmatpush1.bf16.msra.mxu0 0
      %701 = vmatprep.subr.bf16.mxu0 0
      %702 = vmatpush1.bf16.msra.mxu0 0
      %703 = vmatprep.subr.bf16.mxu0 0
      %704 = vmatpush1.bf16.msra.mxu0 0
      %705 = vmatprep.subr.bf16.mxu0 0
      %706 = vmatpush1.bf16.msra.mxu0 0
      %707 = vmatprep.subr.bf16.mxu0 0
      %708 = vmatpush1.bf16.msra.mxu0 0
      %709 = vmatprep.subr.bf16.mxu0 0
      %710 = vmatpush1.bf16.msra.mxu0 0
      %711 = vmatprep.subr.bf16.mxu0 0
      %712 = vmatpush1.bf16.msra.mxu0 0
      %713 = vmatprep.mubr.bf16.mxu0 0
      %714 = vmatmul.mubr.bf16.gmra.mrb[0].mxu0 %v617
      %v715 = vpop.f32.mrb[0].mxu0
      %v716 = vadd.f32 0.0, %v715
      %v717 = vpop.f32.mrb[0].mxu0
      %v718 = vpop.f32.mrb[0].mxu0
      %v719 = vadd.f32 0.0, %v718
      %v720 = vpop.f32.mrb[0].mxu0
      %721 = vmatprep.mubr.bf16.mxu0 0
      %722 = vmatmul.mubr.bf16.gmra.mrb[0].mxu0 %v618
      %v723 = vpop.f32.mrb[0].mxu0
      %v724 = vadd.f32 0.0, %v723
      %v725 = vpop.f32.mrb[0].mxu0
      %v726 = vpop.f32.mrb[0].mxu0
      %v727 = vadd.f32 0.0, %v726
      %v728 = vpop.f32.mrb[0].mxu0
      %729 = vmatprep.mubr.bf16.mxu0 0
      %730 = vmatmul.mubr.bf16.gmra.mrb[0].mxu0 %v619
      %v731 = vpop.f32.mrb[0].mxu0
      %v732 = vadd.f32 0.0, %v731
      %v733 = vpop.f32.mrb[0].mxu0
      %v734 = vpop.f32.mrb[0].mxu0
      %v735 = vadd.f32 0.0, %v734
      %v736 = vpop.f32.mrb[0].mxu0
      %737 = vmatprep.mubr.bf16.mxu0 0
      %738 = vmatmul.mubr.bf16.gmra.mrb[0].mxu0 %v620
      %v739 = vpop.f32.mrb[0].mxu0
      %v740 = vadd.f32 0.0, %v739
      %v741 = vpop.f32.mrb[0].mxu0
      %v742 = vpop.f32.mrb[0].mxu0
      %v743 = vadd.f32 0.0, %v742
      %v744 = vpop.f32.mrb[0].mxu0
      %745 = vmatprep.mubr.bf16.mxu0 0
      %746 = vmatmul.mubr.bf16.gmra.mrb[0].mxu0 %v621
      %v747 = vpop.f32.mrb[0].mxu0
      %v748 = vadd.f32 0.0, %v747
      %v749 = vpop.f32.mrb[0].mxu0
      %v750 = vpop.f32.mrb[0].mxu0
      %v751 = vadd.f32 0.0, %v750
      %v752 = vpop.f32.mrb[0].mxu0
      %753 = vmatprep.mubr.bf16.mxu0 0
      %754 = vmatmul.mubr.bf16.gmra.mrb[0].mxu0 %v622
      %v755 = vpop.f32.mrb[0].mxu0
      %v756 = vadd.f32 0.0, %v755
      %v757 = vpop.f32.mrb[0].mxu0
      %v758 = vpop.f32.mrb[0].mxu0
      %v759 = vadd.f32 0.0, %v758
      %v760 = vpop.f32.mrb[0].mxu0
      %761 = vmatprep.mubr.bf16.mxu0 0
      %762 = vmatmul.mubr.bf16.gmra.mrb[0].mxu0 %v623
      %v763 = vpop.f32.mrb[0].mxu0
      %v764 = vadd.f32 0.0, %v763
      %v765 = vpop.f32.mrb[0].mxu0
      %v766 = vpop.f32.mrb[0].mxu0
      %v767 = vadd.f32 0.0, %v766
      %v768 = vpop.f32.mrb[0].mxu0
      %769 = vmatprep.mubr.bf16.mxu0 0
      %770 = vmatmul.mubr.bf16.gmra.mrb[0].mxu0 %v624
      %v771 = vpop.f32.mrb[0].mxu0
      %v772 = vadd.f32 0.0, %v771
      %v773 = vpop.f32.mrb[0].mxu0
      %v774 = vpop.f32.mrb[0].mxu0
      %v775 = vadd.f32 0.0, %v774
      %v776 = vpop.f32.mrb[0].mxu0
      %777 = vdwg.mxu0
      %v794 = vunpack.c.l.b16 %v553
      %v795 = vunpack.c.l.b16 %v554
      %v796 = vunpack.c.l.b16 %v555
      %v797 = vunpack.c.l.b16 %v556
      %v798 = vunpack.c.l.b16 %v557
      %v799 = vunpack.c.l.b16 %v558
      %v800 = vunpack.c.l.b16 %v559
      %v801 = vunpack.c.l.b16 %v560
      %v802 = vunpack.c.l.b16 %v561
      %v803 = vunpack.c.l.b16 %v562
      %v804 = vunpack.c.l.b16 %v563
      %v805 = vunpack.c.l.b16 %v564
      %v806 = vunpack.c.l.b16 %v565
      %v807 = vunpack.c.l.b16 %v566
      %v808 = vunpack.c.l.b16 %v567
      %v809 = vunpack.c.l.b16 %v568
      %v810 = vpack.c.b16 %v795, %v794
      %v811 = vpack.c.b16 %v797, %v796
      %v812 = vpack.c.b16 %v799, %v798
      %v813 = vpack.c.b16 %v801, %v800
      %v814 = vpack.c.b16 %v803, %v802
      %v815 = vpack.c.b16 %v805, %v804
      %v816 = vpack.c.b16 %v807, %v806
      %v817 = vpack.c.b16 %v809, %v808
      %826 = vmatprep.subr.bf16.mxu0 0
      %827 = vmatpush1.bf16.msra.mxu0 %v810
      %828 = vmatprep.subr.bf16.mxu0 0
      %829 = vmatpush1.bf16.msra.mxu0 %v811
      %830 = vmatprep.subr.bf16.mxu0 0
      %831 = vmatpush1.bf16.msra.mxu0 %v812
      %832 = vmatprep.subr.bf16.mxu0 0
      %833 = vmatpush1.bf16.msra.mxu0 %v813
      %834 = vmatprep.subr.bf16.mxu0 0
      %835 = vmatpush1.bf16.msra.mxu0 %v814
      %836 = vmatprep.subr.bf16.mxu0 0
      %837 = vmatpush1.bf16.msra.mxu0 %v815
      %838 = vmatprep.subr.bf16.mxu0 0
      %839 = vmatpush1.bf16.msra.mxu0 %v816
      %840 = vmatprep.subr.bf16.mxu0 0
      %841 = vmatpush1.bf16.msra.mxu0 %v817
      %842 = vmatprep.subr.bf16.mxu0 0
      %843 = vmatpush1.bf16.msra.mxu0 0
      %844 = vmatprep.subr.bf16.mxu0 0
      %845 = vmatpush1.bf16.msra.mxu0 0
      %846 = vmatprep.subr.bf16.mxu0 0
      %847 = vmatpush1.bf16.msra.mxu0 0
      %848 = vmatprep.subr.bf16.mxu0 0
      %849 = vmatpush1.bf16.msra.mxu0 0
      %850 = vmatprep.subr.bf16.mxu0 0
      %851 = vmatpush1.bf16.msra.mxu0 0
      %852 = vmatprep.subr.bf16.mxu0 0
      %853 = vmatpush1.bf16.msra.mxu0 0
      %854 = vmatprep.subr.bf16.mxu0 0
      %855 = vmatpush1.bf16.msra.mxu0 0
      %856 = vmatprep.subr.bf16.mxu0 0
      %857 = vmatpush1.bf16.msra.mxu0 0
      %858 = vmatprep.mubr.bf16.mxu0 0
      %859 = vmatmul.mubr.bf16.gmra.mrb[0].mxu0 %v545
      %v860 = vpop.f32.mrb[0].mxu0
      %v861 = vadd.f32 %v716, %v860
      %v862 = vpop.f32.mrb[0].mxu0
      %v863 = vpop.f32.mrb[0].mxu0
      %v864 = vadd.f32 %v719, %v863
      %v865 = vpop.f32.mrb[0].mxu0
      %866 = vmatprep.mubr.bf16.mxu0 0
      %867 = vmatmul.mubr.bf16.gmra.mrb[0].mxu0 %v546
      %v868 = vpop.f32.mrb[0].mxu0
      %v869 = vadd.f32 %v724, %v868
      %v870 = vpop.f32.mrb[0].mxu0
      %v871 = vpop.f32.mrb[0].mxu0
      %v872 = vadd.f32 %v727, %v871
      %v873 = vpop.f32.mrb[0].mxu0
      %874 = vmatprep.mubr.bf16.mxu0 0
      %875 = vmatmul.mubr.bf16.gmra.mrb[0].mxu0 %v547
      %v876 = vpop.f32.mrb[0].mxu0
      %v877 = vadd.f32 %v732, %v876
      %v878 = vpop.f32.mrb[0].mxu0
      %v879 = vpop.f32.mrb[0].mxu0
      %v880 = vadd.f32 %v735, %v879
      %v881 = vpop.f32.mrb[0].mxu0
      %882 = vmatprep.mubr.bf16.mxu0 0
      %883 = vmatmul.mubr.bf16.gmra.mrb[0].mxu0 %v548
      %v884 = vpop.f32.mrb[0].mxu0
      %v885 = vadd.f32 %v740, %v884
      %v886 = vpop.f32.mrb[0].mxu0
      %v887 = vpop.f32.mrb[0].mxu0
      %v888 = vadd.f32 %v743, %v887
      %v889 = vpop.f32.mrb[0].mxu0
      %890 = vmatprep.mubr.bf16.mxu0 0
      %891 = vmatmul.mubr.bf16.gmra.mrb[0].mxu0 %v549
      %v892 = vpop.f32.mrb[0].mxu0
      %v893 = vadd.f32 %v748, %v892
      %v894 = vpop.f32.mrb[0].mxu0
      %v895 = vpop.f32.mrb[0].mxu0
      %v896 = vadd.f32 %v751, %v895
      %v897 = vpop.f32.mrb[0].mxu0
      %898 = vmatprep.mubr.bf16.mxu0 0
      %899 = vmatmul.mubr.bf16.gmra.mrb[0].mxu0 %v550
      %v900 = vpop.f32.mrb[0].mxu0
      %v901 = vadd.f32 %v756, %v900
      %v902 = vpop.f32.mrb[0].mxu0
      %v903 = vpop.f32.mrb[0].mxu0
      %v904 = vadd.f32 %v759, %v903
      %v905 = vpop.f32.mrb[0].mxu0
      %906 = vmatprep.mubr.bf16.mxu0 0
      %907 = vmatmul.mubr.bf16.gmra.mrb[0].mxu0 %v551
      %v908 = vpop.f32.mrb[0].mxu0
      %v909 = vadd.f32 %v764, %v908
      %v910 = vpop.f32.mrb[0].mxu0
      %v911 = vpop.f32.mrb[0].mxu0
      %v912 = vadd.f32 %v767, %v911
      %v913 = vpop.f32.mrb[0].mxu0
      %914 = vmatprep.mubr.bf16.mxu0 0
      %915 = vmatmul.mubr.bf16.gmra.mrb[0].mxu0 %v552
      %v916 = vpop.f32.mrb[0].mxu0
      %v917 = vadd.f32 %v772, %v916
      %v918 = vpop.f32.mrb[0].mxu0
      %v919 = vpop.f32.mrb[0].mxu0
      %v920 = vadd.f32 %v775, %v919
      %v921 = vpop.f32.mrb[0].mxu0
      %922 = vdwg.mxu0
      %v923 = vld [vmem:[%s5] sm:$0x1]
      %v925 = vlaneseq
      %v926 = vshrl.u32 %v925, 7
      %v927 = vsub.s32 0, %v926
      %v928 = vrot.slane %v923, %v927
      %v930 = vadd.f32 %v861, %v928
      %v931 = vadd.f32 %v864, %v928
      %v932 = vadd.f32 %v869, %v928
      %v933 = vadd.f32 %v872, %v928
      %v934 = vadd.f32 %v877, %v928
      %v935 = vadd.f32 %v880, %v928
      %v936 = vadd.f32 %v885, %v928
      %v937 = vadd.f32 %v888, %v928
      %v938 = vadd.f32 %v893, %v928
      %v939 = vadd.f32 %v896, %v928
      %v940 = vadd.f32 %v901, %v928
      %v941 = vadd.f32 %v904, %v928
      %v942 = vadd.f32 %v909, %v928
      %v943 = vadd.f32 %v912, %v928
      %v944 = vadd.f32 %v917, %v928
      %v945 = vadd.f32 %v920, %v928
      %v946 = vmax.f32 %v930, 0.0
      %v947 = vmax.f32 %v931, 0.0
      %v948 = vmax.f32 %v932, 0.0
      %v949 = vmax.f32 %v933, 0.0
      %v950 = vmax.f32 %v934, 0.0
      %v951 = vmax.f32 %v935, 0.0
      %v952 = vmax.f32 %v936, 0.0
      %v953 = vmax.f32 %v937, 0.0
      %v954 = vmax.f32 %v938, 0.0
      %v955 = vmax.f32 %v939, 0.0
      %v956 = vmax.f32 %v940, 0.0
      %v957 = vmax.f32 %v941, 0.0
      %v958 = vmax.f32 %v942, 0.0
      %v959 = vmax.f32 %v943, 0.0
      %v960 = vmax.f32 %v944, 0.0
      %v961 = vmax.f32 %v945, 0.0
      %v962 = vld [vmem:[#allocation2 + $0x80] sm:$0xff]
      %v963 = vld [vmem:[#allocation2 + $0x88] sm:$0xff]
      %v964 = vld [vmem:[#allocation2 + $0x90] sm:$0xff]
      %v965 = vld [vmem:[#allocation2 + $0x98] sm:$0xff]
      %v966 = vld [vmem:[#allocation2 + $0xa0] sm:$0xff]
      %v967 = vld [vmem:[#allocation2 + $0xa8] sm:$0xff]
      %v968 = vld [vmem:[#allocation2 + $0xb0] sm:$0xff]
      %v969 = vld [vmem:[#allocation2 + $0xb8] sm:$0xff]
      %v970 = vld [vmem:[#allocation2 + $0xc0] sm:$0xff]
      %v971 = vld [vmem:[#allocation2 + $0xc8] sm:$0xff]
      %v972 = vld [vmem:[#allocation2 + $0xd0] sm:$0xff]
      %v973 = vld [vmem:[#allocation2 + $0xd8] sm:$0xff]
      %v974 = vld [vmem:[#allocation2 + $0xe0] sm:$0xff]
      %v975 = vld [vmem:[#allocation2 + $0xe8] sm:$0xff]
      %v976 = vld [vmem:[#allocation2 + $0xf0] sm:$0xff]
      %v977 = vld [vmem:[#allocation2 + $0xf8] sm:$0xff]
      %v978 = vpack.c.bf16 %v963, %v962
      %v979 = vpack.c.bf16 %v965, %v964
      %v980 = vpack.c.bf16 %v967, %v966
      %v981 = vpack.c.bf16 %v969, %v968
      %v982 = vpack.c.bf16 %v971, %v970
      %v983 = vpack.c.bf16 %v973, %v972
      %v984 = vpack.c.bf16 %v975, %v974
      %v985 = vpack.c.bf16 %v977, %v976
      %s986 = scalar_lea.vmem %s3, 64
      %v987 = vld [vmem:[%s986] sm:$0xf]
      %v988 = vld [vmem:[%s986 + $0x4] sm:$0xf]
      %v989 = vld [vmem:[%s986 + $0x8] sm:$0xf]
      %v990 = vld [vmem:[%s986 + $0xc] sm:$0xf]
      %v991 = vld [vmem:[%s986 + $0x10] sm:$0xf]
      %v992 = vld [vmem:[%s986 + $0x14] sm:$0xf]
      %v993 = vld [vmem:[%s986 + $0x18] sm:$0xf]
      %v994 = vld [vmem:[%s986 + $0x1c] sm:$0xf]
      %v995 = vld [vmem:[%s986 + $0x20] sm:$0xf]
      %v996 = vld [vmem:[%s986 + $0x24] sm:$0xf]
      %v997 = vld [vmem:[%s986 + $0x28] sm:$0xf]
      %v998 = vld [vmem:[%s986 + $0x2c] sm:$0xf]
      %v999 = vld [vmem:[%s986 + $0x30] sm:$0xf]
      %v1000 = vld [vmem:[%s986 + $0x34] sm:$0xf]
      %v1001 = vld [vmem:[%s986 + $0x38] sm:$0xf]
      %v1002 = vld [vmem:[%s986 + $0x3c] sm:$0xf]
      %s1003 = scalar_lea.vmem %s4, 64
      %v1004 = vld [vmem:[%s1003] sm:$0xf]
      %v1005 = vld [vmem:[%s1003 + $0x4] sm:$0xf]
      %v1006 = vld [vmem:[%s1003 + $0x8] sm:$0xf]
      %v1007 = vld [vmem:[%s1003 + $0xc] sm:$0xf]
      %v1008 = vld [vmem:[%s1003 + $0x10] sm:$0xf]
      %v1009 = vld [vmem:[%s1003 + $0x14] sm:$0xf]
      %v1010 = vld [vmem:[%s1003 + $0x18] sm:$0xf]
      %v1011 = vld [vmem:[%s1003 + $0x1c] sm:$0xf]
      %v1012 = vld [vmem:[%s1003 + $0x20] sm:$0xf]
      %v1013 = vld [vmem:[%s1003 + $0x24] sm:$0xf]
      %v1014 = vld [vmem:[%s1003 + $0x28] sm:$0xf]
      %v1015 = vld [vmem:[%s1003 + $0x2c] sm:$0xf]
      %v1016 = vld [vmem:[%s1003 + $0x30] sm:$0xf]
      %v1017 = vld [vmem:[%s1003 + $0x34] sm:$0xf]
      %v1018 = vld [vmem:[%s1003 + $0x38] sm:$0xf]
      %v1019 = vld [vmem:[%s1003 + $0x3c] sm:$0xf]
      %v1036 = vunpack.c.l.b16 %v1004
      %v1037 = vunpack.c.l.b16 %v1005
      %v1038 = vunpack.c.l.b16 %v1006
      %v1039 = vunpack.c.l.b16 %v1007
      %v1040 = vunpack.c.l.b16 %v1008
      %v1041 = vunpack.c.l.b16 %v1009
      %v1042 = vunpack.c.l.b16 %v1010
      %v1043 = vunpack.c.l.b16 %v1011
      %v1044 = vunpack.c.l.b16 %v1012
      %v1045 = vunpack.c.l.b16 %v1013
      %v1046 = vunpack.c.l.b16 %v1014
      %v1047 = vunpack.c.l.b16 %v1015
      %v1048 = vunpack.c.l.b16 %v1016
      %v1049 = vunpack.c.l.b16 %v1017
      %v1050 = vunpack.c.l.b16 %v1018
      %v1051 = vunpack.c.l.b16 %v1019
      %v1052 = vpack.c.b16 %v1037, %v1036
      %v1053 = vpack.c.b16 %v1039, %v1038
      %v1054 = vpack.c.b16 %v1041, %v1040
      %v1055 = vpack.c.b16 %v1043, %v1042
      %v1056 = vpack.c.b16 %v1045, %v1044
      %v1057 = vpack.c.b16 %v1047, %v1046
      %v1058 = vpack.c.b16 %v1049, %v1048
      %v1059 = vpack.c.b16 %v1051, %v1050
      %1068 = vmatprep.subr.bf16.mxu0 0
      %1069 = vmatpush1.bf16.msra.mxu0 %v1052
      %1070 = vmatprep.subr.bf16.mxu0 0
      %1071 = vmatpush1.bf16.msra.mxu0 %v1053
      %1072 = vmatprep.subr.bf16.mxu0 0
      %1073 = vmatpush1.bf16.msra.mxu0 %v1054
      %1074 = vmatprep.subr.bf16.mxu0 0
      %1075 = vmatpush1.bf16.msra.mxu0 %v1055
      %1076 = vmatprep.subr.bf16.mxu0 0
      %1077 = vmatpush1.bf16.msra.mxu0 %v1056
      %1078 = vmatprep.subr.bf16.mxu0 0
      %1079 = vmatpush1.bf16.msra.mxu0 %v1057
      %1080 = vmatprep.subr.bf16.mxu0 0
      %1081 = vmatpush1.bf16.msra.mxu0 %v1058
      %1082 = vmatprep.subr.bf16.mxu0 0
      %1083 = vmatpush1.bf16.msra.mxu0 %v1059
      %1084 = vmatprep.subr.bf16.mxu0 0
      %1085 = vmatpush1.bf16.msra.mxu0 0
      %1086 = vmatprep.subr.bf16.mxu0 0
      %1087 = vmatpush1.bf16.msra.mxu0 0
      %1088 = vmatprep.subr.bf16.mxu0 0
      %1089 = vmatpush1.bf16.msra.mxu0 0
      %1090 = vmatprep.subr.bf16.mxu0 0
      %1091 = vmatpush1.bf16.msra.mxu0 0
      %1092 = vmatprep.subr.bf16.mxu0 0
      %1093 = vmatpush1.bf16.msra.mxu0 0
      %1094 = vmatprep.subr.bf16.mxu0 0
      %1095 = vmatpush1.bf16.msra.mxu0 0
      %1096 = vmatprep.subr.bf16.mxu0 0
      %1097 = vmatpush1.bf16.msra.mxu0 0
      %1098 = vmatprep.subr.bf16.mxu0 0
      %1099 = vmatpush1.bf16.msra.mxu0 0
      %1100 = vmatprep.mubr.bf16.mxu0 0
      %1101 = vmatmul.mubr.bf16.gmra.mrb[0].mxu0 %v617
      %v1102 = vpop.f32.mrb[0].mxu0
      %v1103 = vadd.f32 0.0, %v1102
      %v1104 = vpop.f32.mrb[0].mxu0
      %v1105 = vpop.f32.mrb[0].mxu0
      %v1106 = vadd.f32 0.0, %v1105
      %v1107 = vpop.f32.mrb[0].mxu0
      %1108 = vmatprep.mubr.bf16.mxu0 0
      %1109 = vmatmul.mubr.bf16.gmra.mrb[0].mxu0 %v618
      %v1110 = vpop.f32.mrb[0].mxu0
      %v1111 = vadd.f32 0.0, %v1110
      %v1112 = vpop.f32.mrb[0].mxu0
      %v1113 = vpop.f32.mrb[0].mxu0
      %v1114 = vadd.f32 0.0, %v1113
      %v1115 = vpop.f32.mrb[0].mxu0
      %1116 = vmatprep.mubr.bf16.mxu0 0
      %1117 = vmatmul.mubr.bf16.gmra.mrb[0].mxu0 %v619
      %v1118 = vpop.f32.mrb[0].mxu0
      %v1119 = vadd.f32 0.0, %v1118
      %v1120 = vpop.f32.mrb[0].mxu0
      %v1121 = vpop.f32.mrb[0].mxu0
      %v1122 = vadd.f32 0.0, %v1121
      %v1123 = vpop.f32.mrb[0].mxu0
      %1124 = vmatprep.mubr.bf16.mxu0 0
      %1125 = vmatmul.mubr.bf16.gmra.mrb[0].mxu0 %v620
      %v1126 = vpop.f32.mrb[0].mxu0
      %v1127 = vadd.f32 0.0, %v1126
      %v1128 = vpop.f32.mrb[0].mxu0
      %v1129 = vpop.f32.mrb[0].mxu0
      %v1130 = vadd.f32 0.0, %v1129
      %v1131 = vpop.f32.mrb[0].mxu0
      %1132 = vmatprep.mubr.bf16.mxu0 0
      %1133 = vmatmul.mubr.bf16.gmra.mrb[0].mxu0 %v621
      %v1134 = vpop.f32.mrb[0].mxu0
      %v1135 = vadd.f32 0.0, %v1134
      %v1136 = vpop.f32.mrb[0].mxu0
      %v1137 = vpop.f32.mrb[0].mxu0
      %v1138 = vadd.f32 0.0, %v1137
      %v1139 = vpop.f32.mrb[0].mxu0
      %1140 = vmatprep.mubr.bf16.mxu0 0
      %1141 = vmatmul.mubr.bf16.gmra.mrb[0].mxu0 %v622
      %v1142 = vpop.f32.mrb[0].mxu0
      %v1143 = vadd.f32 0.0, %v1142
      %v1144 = vpop.f32.mrb[0].mxu0
      %v1145 = vpop.f32.mrb[0].mxu0
      %v1146 = vadd.f32 0.0, %v1145
      %v1147 = vpop.f32.mrb[0].mxu0
      %1148 = vmatprep.mubr.bf16.mxu0 0
      %1149 = vmatmul.mubr.bf16.gmra.mrb[0].mxu0 %v623
      %v1150 = vpop.f32.mrb[0].mxu0
      %v1151 = vadd.f32 0.0, %v1150
      %v1152 = vpop.f32.mrb[0].mxu0
      %v1153 = vpop.f32.mrb[0].mxu0
      %v1154 = vadd.f32 0.0, %v1153
      %v1155 = vpop.f32.mrb[0].mxu0
      %1156 = vmatprep.mubr.bf16.mxu0 0
      %1157 = vmatmul.mubr.bf16.gmra.mrb[0].mxu0 %v624
      %v1158 = vpop.f32.mrb[0].mxu0
      %v1159 = vadd.f32 0.0, %v1158
      %v1160 = vpop.f32.mrb[0].mxu0
      %v1161 = vpop.f32.mrb[0].mxu0
      %v1162 = vadd.f32 0.0, %v1161
      %v1163 = vpop.f32.mrb[0].mxu0
      %1164 = vdwg.mxu0
      %v1181 = vunpack.c.l.b16 %v987
      %v1182 = vunpack.c.l.b16 %v988
      %v1183 = vunpack.c.l.b16 %v989
      %v1184 = vunpack.c.l.b16 %v990
      %v1185 = vunpack.c.l.b16 %v991
      %v1186 = vunpack.c.l.b16 %v992
      %v1187 = vunpack.c.l.b16 %v993
      %v1188 = vunpack.c.l.b16 %v994
      %v1189 = vunpack.c.l.b16 %v995
      %v1190 = vunpack.c.l.b16 %v996
      %v1191 = vunpack.c.l.b16 %v997
      %v1192 = vunpack.c.l.b16 %v998
      %v1193 = vunpack.c.l.b16 %v999
      %v1194 = vunpack.c.l.b16 %v1000
      %v1195 = vunpack.c.l.b16 %v1001
      %v1196 = vunpack.c.l.b16 %v1002
      %v1197 = vpack.c.b16 %v1182, %v1181
      %v1198 = vpack.c.b16 %v1184, %v1183
      %v1199 = vpack.c.b16 %v1186, %v1185
      %v1200 = vpack.c.b16 %v1188, %v1187
      %v1201 = vpack.c.b16 %v1190, %v1189
      %v1202 = vpack.c.b16 %v1192, %v1191
      %v1203 = vpack.c.b16 %v1194, %v1193
      %v1204 = vpack.c.b16 %v1196, %v1195
      %1213 = vmatprep.subr.bf16.mxu0 0
      %1214 = vmatpush1.bf16.msra.mxu0 %v1197
      %1215 = vmatprep.subr.bf16.mxu0 0
      %1216 = vmatpush1.bf16.msra.mxu0 %v1198
      %1217 = vmatprep.subr.bf16.mxu0 0
      %1218 = vmatpush1.bf16.msra.mxu0 %v1199
      %1219 = vmatprep.subr.bf16.mxu0 0
      %1220 = vmatpush1.bf16.msra.mxu0 %v1200
      %1221 = vmatprep.subr.bf16.mxu0 0
      %1222 = vmatpush1.bf16.msra.mxu0 %v1201
      %1223 = vmatprep.subr.bf16.mxu0 0
      %1224 = vmatpush1.bf16.msra.mxu0 %v1202
      %1225 = vmatprep.subr.bf16.mxu0 0
      %1226 = vmatpush1.bf16.msra.mxu0 %v1203
      %1227 = vmatprep.subr.bf16.mxu0 0
      %1228 = vmatpush1.bf16.msra.mxu0 %v1204
      %1229 = vmatprep.subr.bf16.mxu0 0
      %1230 = vmatpush1.bf16.msra.mxu0 0
      %1231 = vmatprep.subr.bf16.mxu0 0
      %1232 = vmatpush1.bf16.msra.mxu0 0
      %1233 = vmatprep.subr.bf16.mxu0 0
      %1234 = vmatpush1.bf16.msra.mxu0 0
      %1235 = vmatprep.subr.bf16.mxu0 0
      %1236 = vmatpush1.bf16.msra.mxu0 0
      %1237 = vmatprep.subr.bf16.mxu0 0
      %1238 = vmatpush1.bf16.msra.mxu0 0
      %1239 = vmatprep.subr.bf16.mxu0 0
      %1240 = vmatpush1.bf16.msra.mxu0 0
      %1241 = vmatprep.subr.bf16.mxu0 0
      %1242 = vmatpush1.bf16.msra.mxu0 0
      %1243 = vmatprep.subr.bf16.mxu0 0
      %1244 = vmatpush1.bf16.msra.mxu0 0
      %1245 = vmatprep.mubr.bf16.mxu0 0
      %1246 = vmatmul.mubr.bf16.gmra.mrb[0].mxu0 %v978
      %v1247 = vpop.f32.mrb[0].mxu0
      %v1248 = vadd.f32 %v1103, %v1247
      %v1249 = vpop.f32.mrb[0].mxu0
      %v1250 = vpop.f32.mrb[0].mxu0
      %v1251 = vadd.f32 %v1106, %v1250
      %v1252 = vpop.f32.mrb[0].mxu0
      %1253 = vmatprep.mubr.bf16.mxu0 0
      %1254 = vmatmul.mubr.bf16.gmra.mrb[0].mxu0 %v979
      %v1255 = vpop.f32.mrb[0].mxu0
      %v1256 = vadd.f32 %v1111, %v1255
      %v1257 = vpop.f32.mrb[0].mxu0
      %v1258 = vpop.f32.mrb[0].mxu0
      %v1259 = vadd.f32 %v1114, %v1258
      %v1260 = vpop.f32.mrb[0].mxu0
      %1261 = vmatprep.mubr.bf16.mxu0 0
      %1262 = vmatmul.mubr.bf16.gmra.mrb[0].mxu0 %v980
      %v1263 = vpop.f32.mrb[0].mxu0
      %v1264 = vadd.f32 %v1119, %v1263
      %v1265 = vpop.f32.mrb[0].mxu0
      %v1266 = vpop.f32.mrb[0].mxu0
      %v1267 = vadd.f32 %v1122, %v1266
      %v1268 = vpop.f32.mrb[0].mxu0
      %1269 = vmatprep.mubr.bf16.mxu0 0
      %1270 = vmatmul.mubr.bf16.gmra.mrb[0].mxu0 %v981
      %v1271 = vpop.f32.mrb[0].mxu0
      %v1272 = vadd.f32 %v1127, %v1271
      %v1273 = vpop.f32.mrb[0].mxu0
      %v1274 = vpop.f32.mrb[0].mxu0
      %v1275 = vadd.f32 %v1130, %v1274
      %v1276 = vpop.f32.mrb[0].mxu0
      %1277 = vmatprep.mubr.bf16.mxu0 0
      %1278 = vmatmul.mubr.bf16.gmra.mrb[0].mxu0 %v982
      %v1279 = vpop.f32.mrb[0].mxu0
      %v1280 = vadd.f32 %v1135, %v1279
      %v1281 = vpop.f32.mrb[0].mxu0
      %v1282 = vpop.f32.mrb[0].mxu0
      %v1283 = vadd.f32 %v1138, %v1282
      %v1284 = vpop.f32.mrb[0].mxu0
      %1285 = vmatprep.mubr.bf16.mxu0 0
      %1286 = vmatmul.mubr.bf16.gmra.mrb[0].mxu0 %v983
      %v1287 = vpop.f32.mrb[0].mxu0
      %v1288 = vadd.f32 %v1143, %v1287
      %v1289 = vpop.f32.mrb[0].mxu0
      %v1290 = vpop.f32.mrb[0].mxu0
      %v1291 = vadd.f32 %v1146, %v1290
      %v1292 = vpop.f32.mrb[0].mxu0
      %1293 = vmatprep.mubr.bf16.mxu0 0
      %1294 = vmatmul.mubr.bf16.gmra.mrb[0].mxu0 %v984
      %v1295 = vpop.f32.mrb[0].mxu0
      %v1296 = vadd.f32 %v1151, %v1295
      %v1297 = vpop.f32.mrb[0].mxu0
      %v1298 = vpop.f32.mrb[0].mxu0
      %v1299 = vadd.f32 %v1154, %v1298
      %v1300 = vpop.f32.mrb[0].mxu0
      %1301 = vmatprep.mubr.bf16.mxu0 0
      %1302 = vmatmul.mubr.bf16.gmra.mrb[0].mxu0 %v985
      %v1303 = vpop.f32.mrb[0].mxu0
      %v1304 = vadd.f32 %v1159, %v1303
      %v1305 = vpop.f32.mrb[0].mxu0
      %v1306 = vpop.f32.mrb[0].mxu0
      %v1307 = vadd.f32 %v1162, %v1306
      %v1308 = vpop.f32.mrb[0].mxu0
      %1309 = vdwg.mxu0
      %s1310 = scalar_lea.vmem %s5, 1
      %v1311 = vld [vmem:[%s1310] sm:$0x1]
      %v1313 = vlaneseq
      %v1314 = vshrl.u32 %v1313, 7
      %v1315 = vsub.s32 0, %v1314
      %v1316 = vrot.slane %v1311, %v1315
      %v1318 = vadd.f32 %v1248, %v1316
      %v1319 = vadd.f32 %v1251, %v1316
      %v1320 = vadd.f32 %v1256, %v1316
      %v1321 = vadd.f32 %v1259, %v1316
      %v1322 = vadd.f32 %v1264, %v1316
      %v1323 = vadd.f32 %v1267, %v1316
      %v1324 = vadd.f32 %v1272, %v1316
      %v1325 = vadd.f32 %v1275, %v1316
      %v1326 = vadd.f32 %v1280, %v1316
      %v1327 = vadd.f32 %v1283, %v1316
      %v1328 = vadd.f32 %v1288, %v1316
      %v1329 = vadd.f32 %v1291, %v1316
      %v1330 = vadd.f32 %v1296, %v1316
      %v1331 = vadd.f32 %v1299, %v1316
      %v1332 = vadd.f32 %v1304, %v1316
      %v1333 = vadd.f32 %v1307, %v1316
      %v1334 = vmax.f32 %v1318, 0.0
      %v1335 = vmax.f32 %v1319, 0.0
      %v1336 = vmax.f32 %v1320, 0.0
      %v1337 = vmax.f32 %v1321, 0.0
      %v1338 = vmax.f32 %v1322, 0.0
      %v1339 = vmax.f32 %v1323, 0.0
      %v1340 = vmax.f32 %v1324, 0.0
      %v1341 = vmax.f32 %v1325, 0.0
      %v1342 = vmax.f32 %v1326, 0.0
      %v1343 = vmax.f32 %v1327, 0.0
      %v1344 = vmax.f32 %v1328, 0.0
      %v1345 = vmax.f32 %v1329, 0.0
      %v1346 = vmax.f32 %v1330, 0.0
      %v1347 = vmax.f32 %v1331, 0.0
      %v1348 = vmax.f32 %v1332, 0.0
      %v1349 = vmax.f32 %v1333, 0.0
      %1366 = vrot.lane.b32.xlu0 %v1334, 32
      %v1367 = vpop.permute.xlu0 %1366
      %1368 = vrot.lane.b32.xlu0 %v1335, 32
      %v1369 = vpop.permute.xlu0 %1368
      %1370 = vrot.lane.b32.xlu0 %v1336, 32
      %v1371 = vpop.permute.xlu0 %1370
      %1372 = vrot.lane.b32.xlu0 %v1337, 32
      %v1373 = vpop.permute.xlu0 %1372
      %1374 = vrot.lane.b32.xlu0 %v1338, 32
      %v1375 = vpop.permute.xlu0 %1374
      %1376 = vrot.lane.b32.xlu0 %v1339, 32
      %v1377 = vpop.permute.xlu0 %1376
      %1378 = vrot.lane.b32.xlu0 %v1340, 32
      %v1379 = vpop.permute.xlu0 %1378
      %1380 = vrot.lane.b32.xlu0 %v1341, 32
      %v1381 = vpop.permute.xlu0 %1380
      %1382 = vrot.lane.b32.xlu0 %v1342, 32
      %v1383 = vpop.permute.xlu0 %1382
      %1384 = vrot.lane.b32.xlu0 %v1343, 32
      %v1385 = vpop.permute.xlu0 %1384
      %1386 = vrot.lane.b32.xlu0 %v1344, 32
      %v1387 = vpop.permute.xlu0 %1386
      %1388 = vrot.lane.b32.xlu0 %v1345, 32
      %v1389 = vpop.permute.xlu0 %1388
      %1390 = vrot.lane.b32.xlu0 %v1346, 32
      %v1391 = vpop.permute.xlu0 %1390
      %1392 = vrot.lane.b32.xlu0 %v1347, 32
      %v1393 = vpop.permute.xlu0 %1392
      %1394 = vrot.lane.b32.xlu0 %v1348, 32
      %v1395 = vpop.permute.xlu0 %1394
      %1396 = vrot.lane.b32.xlu0 %v1349, 32
      %v1397 = vpop.permute.xlu0 %1396
      %vm1414 = vcmask 261120
      %v1415 = vsel %vm1414, %v946, %v1367
      %v1416 = vsel %vm1414, %v947, %v1369
      %v1417 = vsel %vm1414, %v948, %v1371
      %v1418 = vsel %vm1414, %v949, %v1373
      %v1419 = vsel %vm1414, %v950, %v1375
      %v1420 = vsel %vm1414, %v951, %v1377
      %v1421 = vsel %vm1414, %v952, %v1379
      %v1422 = vsel %vm1414, %v953, %v1381
      %v1423 = vsel %vm1414, %v954, %v1383
      %v1424 = vsel %vm1414, %v955, %v1385
      %v1425 = vsel %vm1414, %v956, %v1387
      %v1426 = vsel %vm1414, %v957, %v1389
      %v1427 = vsel %vm1414, %v958, %v1391
      %v1428 = vsel %vm1414, %v959, %v1393
      %v1429 = vsel %vm1414, %v960, %v1395
      %v1430 = vsel %vm1414, %v961, %v1397
      %vm1431 = vcmask 523264
      %v1432 = vsel %vm1431, %v1415, 0.0
      %v1433 = vsel %vm1431, %v1416, 0.0
      %v1434 = vsel %vm1431, %v1417, 0.0
      %v1435 = vsel %vm1431, %v1418, 0.0
      %v1436 = vsel %vm1431, %v1419, 0.0
      %v1437 = vsel %vm1431, %v1420, 0.0
      %v1438 = vsel %vm1431, %v1421, 0.0
      %v1439 = vsel %vm1431, %v1422, 0.0
      %v1440 = vsel %vm1431, %v1423, 0.0
      %v1441 = vsel %vm1431, %v1424, 0.0
      %v1442 = vsel %vm1431, %v1425, 0.0
      %v1443 = vsel %vm1431, %v1426, 0.0
      %v1444 = vsel %vm1431, %v1427, 0.0
      %v1445 = vsel %vm1431, %v1428, 0.0
      %v1446 = vsel %vm1431, %v1429, 0.0
      %v1447 = vsel %vm1431, %v1430, 0.0
      %v1448 = vpack.c.bf16 %v1433, %v1432
      %v1449 = vpack.c.bf16 %v1435, %v1434
      %v1450 = vpack.c.bf16 %v1437, %v1436
      %v1451 = vpack.c.bf16 %v1439, %v1438
      %v1452 = vpack.c.bf16 %v1441, %v1440
      %v1453 = vpack.c.bf16 %v1443, %v1442
      %v1454 = vpack.c.bf16 %v1445, %v1444
      %v1455 = vpack.c.bf16 %v1447, %v1446
      %v1464 = vunpack.c.l.b16 %v1448
      %v1465 = vunpack.c.h.b16 %v1448
      %v1466 = vunpack.c.l.b16 %v1449
      %v1467 = vunpack.c.h.b16 %v1449
      %v1468 = vunpack.c.l.b16 %v1450
      %v1469 = vunpack.c.h.b16 %v1450
      %v1470 = vunpack.c.l.b16 %v1451
      %v1471 = vunpack.c.h.b16 %v1451
      %v1472 = vunpack.c.l.b16 %v1452
      %v1473 = vunpack.c.h.b16 %v1452
      %v1474 = vunpack.c.l.b16 %v1453
      %v1475 = vunpack.c.h.b16 %v1453
      %v1476 = vunpack.c.l.b16 %v1454
      %v1477 = vunpack.c.h.b16 %v1454
      %v1478 = vunpack.c.l.b16 %v1455
      %v1479 = vunpack.c.h.b16 %v1455
      %v1480 = vpack.c.b16 %v1464, %v1464
      %v1481 = vpack.c.b16 %v1465, %v1465
      %v1482 = vpack.c.b16 %v1466, %v1466
      %v1483 = vpack.c.b16 %v1467, %v1467
      %v1484 = vpack.c.b16 %v1468, %v1468
      %v1485 = vpack.c.b16 %v1469, %v1469
      %v1486 = vpack.c.b16 %v1470, %v1470
      %v1487 = vpack.c.b16 %v1471, %v1471
      %v1488 = vpack.c.b16 %v1472, %v1472
      %v1489 = vpack.c.b16 %v1473, %v1473
      %v1490 = vpack.c.b16 %v1474, %v1474
      %v1491 = vpack.c.b16 %v1475, %v1475
      %v1492 = vpack.c.b16 %v1476, %v1476
      %v1493 = vpack.c.b16 %v1477, %v1477
      %v1494 = vpack.c.b16 %v1478, %v1478
      %v1495 = vpack.c.b16 %v1479, %v1479
      %1512 = vst [vmem:[#allocation3] sm:$0xf] %v1480
      %1513 = vst [vmem:[#allocation3 + $0x4] sm:$0xf] %v1481
      %1514 = vst [vmem:[#allocation3 + $0x8] sm:$0xf] %v1482
      %1515 = vst [vmem:[#allocation3 + $0xc] sm:$0xf] %v1483
      %1516 = vst [vmem:[#allocation3 + $0x10] sm:$0xf] %v1484
      %1517 = vst [vmem:[#allocation3 + $0x14] sm:$0xf] %v1485
      %1518 = vst [vmem:[#allocation3 + $0x18] sm:$0xf] %v1486
      %1519 = vst [vmem:[#allocation3 + $0x1c] sm:$0xf] %v1487
      %1520 = vst [vmem:[#allocation3 + $0x20] sm:$0xf] %v1488
      %1521 = vst [vmem:[#allocation3 + $0x24] sm:$0xf] %v1489
      %1522 = vst [vmem:[#allocation3 + $0x28] sm:$0xf] %v1490
      %1523 = vst [vmem:[#allocation3 + $0x2c] sm:$0xf] %v1491
      %1524 = vst [vmem:[#allocation3 + $0x30] sm:$0xf] %v1492
      %1525 = vst [vmem:[#allocation3 + $0x34] sm:$0xf] %v1493
      %1526 = vst [vmem:[#allocation3 + $0x38] sm:$0xf] %v1494
      %1527 = vst [vmem:[#allocation3 + $0x3c] sm:$0xf] %v1495
    $region33: #{tpu_custom_call.1} parent=1 // pred_fallthru
      _
    // Predicated region
    $region34: #{tpu_custom_call.1} parent=1 // pred_check
      _
    $region35: #{tpu_custom_call.1} parent=1 // pred_check_branch
      %1529 = sbr.rel (0) target = $region37
    $region36: #{tpu_custom_call.1} parent=1 // pred_region
      %s1531 = ssub.s32 1024, 1024
      %1532 = vsyncadd [#allocation4], %s1531
      %s1533 = sshll.u32 [#allocation3], 4
      %s1534 = int_to_ptr.vmem [resolvable:$true] %s1533
      %1539 = dma.vmem_to_hbm [thread:$0]  %s1534, 1024, %s6, [#allocation4], 64, 64, 4
    $region37: #{tpu_custom_call.1} parent=1 // pred_fallthru
      _
    // Predicated region
    $region38: #{tpu_custom_call.1} parent=1 // pred_check
      _
    $region39: #{tpu_custom_call.1} parent=1 // pred_check_branch
      %1541 = sbr.rel (0) target = $region41
    $region40: #{tpu_custom_call.1} parent=1 // pred_region
      %1542 = dma.done [#allocation4], 1024
    $region41: #{tpu_custom_call.1} parent=1 // pred_fallthru
      _
    %1543 = vsyncpa [#allocation4], 1

</llo_original>
